<compile_context>
chip_gen: v7x
topology: tpu7x:2x2x1
jax: 0.10.0
libtpu: 0.0.40
codegen_flags: <defaults>
</compile_context>

<pallas_src>
import functools
import math

import jax
import jax.numpy as jnp
from jax.experimental import pallas as pl
from jax.experimental.pallas import tpu as pltpu


def club_tile_kernel(x_ref, y_ref, w1_ref, b1_ref, w2m_ref, b2m_ref,
                     w2v_ref, b2v_ref, mean_y_ref, mean_y2_ref, out_ref):
    """Per-sample CLUB loss for one tile of TILE_N samples.

    out[t, 0] = sum_f (positive - negative)[t, f]
              = sum_f -0.5*exp(-logvar) * ((y^2 - mean_y2) + 2*mu*(mean_y - y))
    """
    x = x_ref[...]                                # [T, x_dim]   (f32 or bf16)
    y = y_ref[...]                                # [T, y_dim]   f32

    w1 = w1_ref[...]                              # [x_dim, 2H]
    w2m = w2m_ref[...]                            # [2H, y_dim]  (lower half zero)
    w2v = w2v_ref[...]                            # [2H, y_dim]  (upper half zero)

    # Fused first layer for both branches: one MXU matmul + one ReLU.
    h = jnp.dot(x, w1, preferred_element_type=jnp.float32) + b1_ref[...]
    h = jnp.maximum(h, 0.0).astype(w2m.dtype)     # [T, 2H]

    mu = jnp.dot(h, w2m, preferred_element_type=jnp.float32) + b2m_ref[...]
    logvar = jnp.tanh(
        jnp.dot(h, w2v, preferred_element_type=jnp.float32) + b2v_ref[...])

    inv_var = jnp.exp(-logvar)                    # EUP
    mean_y = mean_y_ref[...]                      # [1, y_dim]
    mean_y2 = mean_y2_ref[...]                    # [1, y_dim]

    # (positive - negative) with a single fused scale, then one lane reduction.
    per_feat = ((y * y - mean_y2) + 2.0 * mu * (mean_y - y)) * (-0.5 * inv_var)
    out_ref[...] = jnp.sum(per_feat, axis=-1, keepdims=True)   # [T, 1]


@functools.partial(jax.jit, static_argnames=("tile_n", "use_bf16_matmul"))
def club_forward(x_samples, y_samples, params, *, tile_n=256,
                 use_bf16_matmul=False):
    """Full CLUB forward pass; tiled/pipelined over the sample axis."""
    n, x_dim = x_samples.shape
    _, y_dim = y_samples.shape
    hidden = params["w1m"].shape[1]

    y_f32 = y_samples.astype(jnp.float32)
    # Global row-means of y: this is what removes the O(N^2) intermediate.
    mean_y = jnp.mean(y_f32, axis=0, keepdims=True)            # [1, y_dim]
    mean_y2 = jnp.mean(y_f32 * y_f32, axis=0, keepdims=True)   # [1, y_dim]

    # Fuse the two first layers; zero-pad second-layer weights so both
    # branches read the fused hidden activation without lane slicing.
    w1 = jnp.concatenate([params["w1m"], params["w1v"]], axis=1)   # [x_dim, 2H]
    b1 = jnp.concatenate([params["b1m"], params["b1v"]], axis=1)   # [1, 2H]
    zeros_h = jnp.zeros((hidden, y_dim), params["w2m"].dtype)
    w2m = jnp.concatenate([params["w2m"], zeros_h], axis=0)        # [2H, y_dim]
    w2v = jnp.concatenate([zeros_h, params["w2v"]], axis=0)        # [2H, y_dim]
    b2m, b2v = params["b2m"], params["b2v"]

    mm_dtype = jnp.bfloat16 if use_bf16_matmul else jnp.float32
    x_mm = x_samples.astype(mm_dtype)
    w1 = w1.astype(mm_dtype)
    w2m = w2m.astype(mm_dtype)
    w2v = w2v.astype(mm_dtype)

    # Tile the sample axis; pad N to a multiple of tile_n (padded rows yield
    # finite values and are dropped before the final mean).
    tile_n = min(tile_n, pl.cdiv(n, 8) * 8)
    n_pad = pl.cdiv(n, tile_n) * tile_n
    if n_pad != n:
        x_mm = jnp.pad(x_mm, ((0, n_pad - n), (0, 0)))
        y_f32 = jnp.pad(y_f32, ((0, n_pad - n), (0, 0)))

    num_tiles = n_pad // tile_n
    tiled = lambda i: (i, 0)     # per-tile blocks of x / y / per-sample output
    const = lambda i: (0, 0)     # weights & y-statistics stay VMEM-resident

    per_sample = pl.pallas_call(
        club_tile_kernel,
        out_shape=jax.ShapeDtypeStruct((n_pad, 1), jnp.float32),
        grid_spec=pltpu.PrefetchScalarGridSpec(
            num_scalar_prefetch=0,
            grid=(num_tiles,),
            in_specs=[
                pl.BlockSpec((tile_n, x_dim), tiled),         # x tile
                pl.BlockSpec((tile_n, y_dim), tiled),         # y tile
                pl.BlockSpec((x_dim, 2 * hidden), const),     # fused W1
                pl.BlockSpec((1, 2 * hidden), const),         # fused b1
                pl.BlockSpec((2 * hidden, y_dim), const),     # W2 (mu branch)
                pl.BlockSpec((1, y_dim), const),              # b2 (mu)
                pl.BlockSpec((2 * hidden, y_dim), const),     # W2 (logvar branch)
                pl.BlockSpec((1, y_dim), const),              # b2 (logvar)
                pl.BlockSpec((1, y_dim), const),              # mean_y
                pl.BlockSpec((1, y_dim), const),              # mean_y2
            ],
            out_specs=pl.BlockSpec((tile_n, 1), tiled),
        ),
        compiler_params=pltpu.CompilerParams(
            dimension_semantics=("parallel",)),
    )(x_mm, y_f32, w1, b1, w2m, b2m, w2v, b2v, mean_y, mean_y2)

    return jnp.mean(per_sample[:n, 0])


def init_club_params(key, x_dim, y_dim, hidden_size):
    """Deterministic init mimicking nn.Linear default (uniform +/- 1/sqrt(fan_in)).

    Weights are stored pre-transposed to [in, out] (PyTorch stores [out, in]).
    """
    def linear(k, fan_in, fan_out):
        kw, kb = jax.random.split(k)
        bound = 1.0 / math.sqrt(fan_in)
        w = jax.random.uniform(kw, (fan_in, fan_out), jnp.float32, -bound, bound)
        b = jax.random.uniform(kb, (1, fan_out), jnp.float32, -bound, bound)
        return w, b

    k0, k1, k2, k3 = jax.random.split(key, 4)
    w1m, b1m = linear(k0, x_dim, hidden_size)
    w2m, b2m = linear(k1, hidden_size, y_dim)
    w1v, b1v = linear(k2, x_dim, hidden_size)
    w2v, b2v = linear(k3, hidden_size, y_dim)
    return dict(w1m=w1m, b1m=b1m, w2m=w2m, b2m=b2m,
                w1v=w1v, b1v=b1v, w2v=w2v, b2v=b2v)


def club_forward_ref(x, y, p, mm_dtype=jnp.float32):
    """Pure-JAX reference reproducing the PyTorch forward exactly (O(N^2) form).

    `mm_dtype` casts matmul inputs (f32 accumulation) to mirror the kernel's
    optional bf16 MXU path.
    """
    c = lambda a: a.astype(mm_dtype)
    dot = lambda a, b: jnp.dot(c(a), c(b), preferred_element_type=jnp.float32)
    h_mu = jax.nn.relu(dot(x, p["w1m"]) + p["b1m"])
    mu = dot(h_mu, p["w2m"]) + p["b2m"]
    h_lv = jax.nn.relu(dot(x, p["w1v"]) + p["b1v"])
    logvar = jnp.tanh(dot(h_lv, p["w2v"]) + p["b2v"])
    positive = -(mu - y) ** 2 / 2.0 / jnp.exp(logvar)
    negative = -jnp.mean((y[None, :, :] - mu[:, None, :]) ** 2, axis=1) / 2.0 / jnp.exp(logvar)
    return jnp.mean(positive.sum(-1) - negative.sum(-1))


# TODO(synk): loglikeli()/learning_loss() of the original module are not kernelized
# here; only forward() (the spec'd pass) is implemented.

if __name__ == "__main__":
    N, X_DIM, Y_DIM, HIDDEN = 512, 32, 16, 32

    key = jax.random.PRNGKey(0)
    kx, ky, kp = jax.random.split(key, 3)
    x_samples = jax.random.normal(kx, (N, X_DIM), jnp.float32)
    y_samples = jax.random.normal(ky, (N, Y_DIM), jnp.float32)
    params = init_club_params(kp, X_DIM, Y_DIM, HIDDEN)

    # f32 path: must match the PyTorch-equivalent reference tightly.
    out = jax.block_until_ready(
        club_forward(x_samples, y_samples, params, tile_n=256))
    ref = club_forward_ref(x_samples, y_samples, params)
    assert jnp.allclose(out, ref, rtol=1e-4, atol=1e-4), (out, ref)

    # bf16-MXU fast path (v6e/v7x): compare against a reference using the same
    # bf16 matmul inputs with f32 accumulation.
    out_bf16 = jax.block_until_ready(
        club_forward(x_samples, y_samples, params, tile_n=256,
                     use_bf16_matmul=True))
    ref_bf16 = club_forward_ref(x_samples, y_samples, params,
                                mm_dtype=jnp.bfloat16)
    assert jnp.allclose(out_bf16, ref_bf16, rtol=1e-3, atol=1e-3), (out_bf16, ref_bf16)

    print("KERNEL_OK")
</pallas_src>

<mosaic_0001>
module attributes {stable_mosaic.version = 11 : i64} {
  func.func @club_tile_kernel(%arg0: i32, %arg1: memref<256x32xf32, #tpu.memory_space<vmem>>, %arg2: memref<256x16xf32, #tpu.memory_space<vmem>>, %arg3: memref<32x64xf32, #tpu.memory_space<vmem>>, %arg4: memref<1x64xf32, #tpu.memory_space<vmem>>, %arg5: memref<64x16xf32, #tpu.memory_space<vmem>>, %arg6: memref<1x16xf32, #tpu.memory_space<vmem>>, %arg7: memref<64x16xf32, #tpu.memory_space<vmem>>, %arg8: memref<1x16xf32, #tpu.memory_space<vmem>>, %arg9: memref<1x16xf32, #tpu.memory_space<vmem>>, %arg10: memref<1x16xf32, #tpu.memory_space<vmem>>, %arg11: memref<256x1xf32, #tpu.memory_space<vmem>>) attributes {dimension_semantics = [#tpu.dimension_semantics<parallel>], iteration_bounds = array<i64: 2>, scalar_prefetch = 0 : i64, scratch_operands = 0 : i64, tpu.core_type = #tpu.core_type<tc>, window_params = [{transform_indices = @transform_0, window_bounds = array<i64: 256, 32>}, {transform_indices = @transform_1, window_bounds = array<i64: 256, 16>}, {pipeline_mode = #tpu.pipeline_mode<synchronous>, transform_indices = @transform_2, window_bounds = array<i64: 32, 64>}, {pipeline_mode = #tpu.pipeline_mode<synchronous>, transform_indices = @transform_3, window_bounds = array<i64: 1, 64>}, {pipeline_mode = #tpu.pipeline_mode<synchronous>, transform_indices = @transform_4, window_bounds = array<i64: 64, 16>}, {pipeline_mode = #tpu.pipeline_mode<synchronous>, transform_indices = @transform_5, window_bounds = array<i64: 1, 16>}, {pipeline_mode = #tpu.pipeline_mode<synchronous>, transform_indices = @transform_6, window_bounds = array<i64: 64, 16>}, {pipeline_mode = #tpu.pipeline_mode<synchronous>, transform_indices = @transform_7, window_bounds = array<i64: 1, 16>}, {pipeline_mode = #tpu.pipeline_mode<synchronous>, transform_indices = @transform_8, window_bounds = array<i64: 1, 16>}, {pipeline_mode = #tpu.pipeline_mode<synchronous>, transform_indices = @transform_9, window_bounds = array<i64: 1, 16>}, {transform_indices = @transform_10, window_bounds = array<i64: 256, 1>}]} {
    %c0 = arith.constant 0 : index
    %c0_0 = arith.constant 0 : index
    %0 = vector.load %arg1[%c0, %c0_0] : memref<256x32xf32, #tpu.memory_space<vmem>>, vector<256x32xf32>
    %c0_1 = arith.constant 0 : index
    %c0_2 = arith.constant 0 : index
    %1 = vector.load %arg2[%c0_1, %c0_2] : memref<256x16xf32, #tpu.memory_space<vmem>>, vector<256x16xf32>
    %c0_3 = arith.constant 0 : index
    %c0_4 = arith.constant 0 : index
    %2 = vector.load %arg3[%c0_3, %c0_4] : memref<32x64xf32, #tpu.memory_space<vmem>>, vector<32x64xf32>
    %c0_5 = arith.constant 0 : index
    %c0_6 = arith.constant 0 : index
    %3 = vector.load %arg5[%c0_5, %c0_6] : memref<64x16xf32, #tpu.memory_space<vmem>>, vector<64x16xf32>
    %c0_7 = arith.constant 0 : index
    %c0_8 = arith.constant 0 : index
    %4 = vector.load %arg7[%c0_7, %c0_8] : memref<64x16xf32, #tpu.memory_space<vmem>>, vector<64x16xf32>
    %cst = arith.constant dense<0.000000e+00> : vector<256x64xf32>
    %5 = tpu.matmul %0, %2, %cst {dimension_numbers = #tpu.dot_dimension_numbers<[1], [0], [0], [1], [0, 0, 1, 1], [], []>} : vector<256x32xf32>, vector<32x64xf32>, vector<256x64xf32> -> vector<256x64xf32>
    %c0_9 = arith.constant 0 : index
    %c0_10 = arith.constant 0 : index
    %6 = vector.load %arg4[%c0_9, %c0_10] : memref<1x64xf32, #tpu.memory_space<vmem>>, vector<1x64xf32>
    %7 = vector.broadcast %6 : vector<1x64xf32> to vector<256x64xf32>
    %8 = arith.addf %5, %7 : vector<256x64xf32>
    %cst_11 = arith.constant 0.000000e+00 : f32
    %9 = vector.broadcast %cst_11 : f32 to vector<256x64xf32>
    %10 = arith.maximumf %8, %9 : vector<256x64xf32>
    %cst_12 = arith.constant dense<0.000000e+00> : vector<256x16xf32>
    %11 = tpu.matmul %10, %3, %cst_12 {dimension_numbers = #tpu.dot_dimension_numbers<[1], [0], [0], [1], [0, 0, 1, 1], [], []>} : vector<256x64xf32>, vector<64x16xf32>, vector<256x16xf32> -> vector<256x16xf32>
    %c0_13 = arith.constant 0 : index
    %c0_14 = arith.constant 0 : index
    %12 = vector.load %arg6[%c0_13, %c0_14] : memref<1x16xf32, #tpu.memory_space<vmem>>, vector<1x16xf32>
    %13 = vector.broadcast %12 : vector<1x16xf32> to vector<256x16xf32>
    %14 = arith.addf %11, %13 : vector<256x16xf32>
    %cst_15 = arith.constant dense<0.000000e+00> : vector<256x16xf32>
    %15 = tpu.matmul %10, %4, %cst_15 {dimension_numbers = #tpu.dot_dimension_numbers<[1], [0], [0], [1], [0, 0, 1, 1], [], []>} : vector<256x64xf32>, vector<64x16xf32>, vector<256x16xf32> -> vector<256x16xf32>
    %c0_16 = arith.constant 0 : index
    %c0_17 = arith.constant 0 : index
    %16 = vector.load %arg8[%c0_16, %c0_17] : memref<1x16xf32, #tpu.memory_space<vmem>>, vector<1x16xf32>
    %17 = vector.broadcast %16 : vector<1x16xf32> to vector<256x16xf32>
    %18 = arith.addf %15, %17 : vector<256x16xf32>
    %19 = math.tanh %18 : vector<256x16xf32>
    %cst_18 = arith.constant 0.000000e+00 : f32
    %20 = vector.broadcast %cst_18 : f32 to vector<256x16xf32>
    %21 = arith.subf %20, %19 : vector<256x16xf32>
    %22 = math.exp %21 : vector<256x16xf32>
    %c0_19 = arith.constant 0 : index
    %c0_20 = arith.constant 0 : index
    %23 = vector.load %arg9[%c0_19, %c0_20] : memref<1x16xf32, #tpu.memory_space<vmem>>, vector<1x16xf32>
    %c0_21 = arith.constant 0 : index
    %c0_22 = arith.constant 0 : index
    %24 = vector.load %arg10[%c0_21, %c0_22] : memref<1x16xf32, #tpu.memory_space<vmem>>, vector<1x16xf32>
    %25 = arith.mulf %1, %1 : vector<256x16xf32>
    %26 = vector.broadcast %24 : vector<1x16xf32> to vector<256x16xf32>
    %27 = arith.subf %25, %26 : vector<256x16xf32>
    %cst_23 = arith.constant 2.000000e+00 : f32
    %28 = vector.broadcast %cst_23 : f32 to vector<256x16xf32>
    %29 = arith.mulf %28, %14 : vector<256x16xf32>
    %30 = vector.broadcast %23 : vector<1x16xf32> to vector<256x16xf32>
    %31 = arith.subf %30, %1 : vector<256x16xf32>
    %32 = arith.mulf %29, %31 : vector<256x16xf32>
    %33 = arith.addf %27, %32 : vector<256x16xf32>
    %cst_24 = arith.constant -5.000000e-01 : f32
    %34 = vector.broadcast %cst_24 : f32 to vector<256x16xf32>
    %35 = arith.mulf %34, %22 : vector<256x16xf32>
    %36 = arith.mulf %33, %35 : vector<256x16xf32>
    %cst_25 = arith.constant dense<0.000000e+00> : vector<256xf32>
    %37 = vector.multi_reduction <add>, %36, %cst_25 [1] : vector<256x16xf32> to vector<256xf32>
    %38 = vector.shape_cast %37 : vector<256xf32> to vector<256x1xf32>
    %c0_26 = arith.constant 0 : index
    %c0_27 = arith.constant 0 : index
    %39 = vector.load %arg11[%c0_26, %c0_27] : memref<256x1xf32, #tpu.memory_space<vmem>>, vector<256x1xf32>
    tpu.vector_store %arg11[%c0_26, %c0_27], %38 {strides = array<i32>} : memref<256x1xf32, #tpu.memory_space<vmem>>, vector<256x1xf32>,
    return
  }
  func.func @transform_0(%arg0: i32) -> (i32, i32) {
    %c0_i32 = arith.constant 0 : i32
    %c0_i32_0 = arith.constant 0 : i32
    return %arg0, %c0_i32 : i32, i32
  }
  func.func @transform_1(%arg0: i32) -> (i32, i32) {
    %c0_i32 = arith.constant 0 : i32
    %c0_i32_0 = arith.constant 0 : i32
    return %arg0, %c0_i32 : i32, i32
  }
  func.func @transform_2(%arg0: i32) -> (i32, i32) {
    %c0_i32 = arith.constant 0 : i32
    %c0_i32_0 = arith.constant 0 : i32
    %c0_i32_1 = arith.constant 0 : i32
    return %c0_i32, %c0_i32_0 : i32, i32
  }
  func.func @transform_3(%arg0: i32) -> (i32, i32) {
    %c0_i32 = arith.constant 0 : i32
    %c0_i32_0 = arith.constant 0 : i32
    %c0_i32_1 = arith.constant 0 : i32
    return %c0_i32, %c0_i32_0 : i32, i32
  }
  func.func @transform_4(%arg0: i32) -> (i32, i32) {
    %c0_i32 = arith.constant 0 : i32
    %c0_i32_0 = arith.constant 0 : i32
    %c0_i32_1 = arith.constant 0 : i32
    return %c0_i32, %c0_i32_0 : i32, i32
  }
  func.func @transform_5(%arg0: i32) -> (i32, i32) {
    %c0_i32 = arith.constant 0 : i32
    %c0_i32_0 = arith.constant 0 : i32
    %c0_i32_1 = arith.constant 0 : i32
    return %c0_i32, %c0_i32_0 : i32, i32
  }
  func.func @transform_6(%arg0: i32) -> (i32, i32) {
    %c0_i32 = arith.constant 0 : i32
    %c0_i32_0 = arith.constant 0 : i32
    %c0_i32_1 = arith.constant 0 : i32
    return %c0_i32, %c0_i32_0 : i32, i32
  }
  func.func @transform_7(%arg0: i32) -> (i32, i32) {
    %c0_i32 = arith.constant 0 : i32
    %c0_i32_0 = arith.constant 0 : i32
    %c0_i32_1 = arith.constant 0 : i32
    return %c0_i32, %c0_i32_0 : i32, i32
  }
  func.func @transform_8(%arg0: i32) -> (i32, i32) {
    %c0_i32 = arith.constant 0 : i32
    %c0_i32_0 = arith.constant 0 : i32
    %c0_i32_1 = arith.constant 0 : i32
    return %c0_i32, %c0_i32_0 : i32, i32
  }
  func.func @transform_9(%arg0: i32) -> (i32, i32) {
    %c0_i32 = arith.constant 0 : i32
    %c0_i32_0 = arith.constant 0 : i32
    %c0_i32_1 = arith.constant 0 : i32
    return %c0_i32, %c0_i32_0 : i32, i32
  }
  func.func @transform_10(%arg0: i32) -> (i32, i32) {
    %c0_i32 = arith.constant 0 : i32
    %c0_i32_0 = arith.constant 0 : i32
    return %arg0, %c0_i32 : i32, i32
  }
}

</mosaic_0001>

<llo_original>
// kernel: club_forward.1
$region0: #{club_forward.1}
  #allocation0 [shape = 'u32[]', space=smem, size = 0x4, offset = 0x4, fixed_abs, tag = 'smem constant byte address 0x4 - core index']
  #allocation1 [shape = 'u32[144,128]{1,0:T(1,128)}', space=vmem, size = 0x12000, scoped, tag = 'internal scratch']
  %s0 = inlined_call_operand.vmem [shape: f32[512,32], index: 0, kind: input, shape index: {}]
  %s1 = inlined_call_operand.vmem [shape: f32[512,16], index: 1, kind: input, shape index: {}]
  %s2 = inlined_call_operand.vmem [shape: f32[32,64], index: 2, kind: input, shape index: {}]
  %s3 = inlined_call_operand.vmem [shape: f32[1,64], index: 3, kind: input, shape index: {}]
  %s4 = inlined_call_operand.vmem [shape: f32[64,16], index: 4, kind: input, shape index: {}]
  %s5 = inlined_call_operand.vmem [shape: f32[1,16], index: 5, kind: input, shape index: {}]
  %s6 = inlined_call_operand.vmem [shape: f32[64,16], index: 6, kind: input, shape index: {}]
  %s7 = inlined_call_operand.vmem [shape: f32[1,16], index: 7, kind: input, shape index: {}]
  %s8 = inlined_call_operand.vmem [shape: f32[1,16], index: 8, kind: input, shape index: {}]
  %s9 = inlined_call_operand.vmem [shape: f32[1,16], index: 9, kind: input, shape index: {}]
  %s10 = inlined_call_operand.vmem [shape: f32[512,1], index: 10, kind: output, shape index: {}]
  %s11 = sld [smem:[#allocation0]]
  $region73: #{club_forward.1} parent=0
    _
  %s13 = ssub.s32 1, %s11
  %s14 = scalar_select 0, %s13, %s11
  loop: start=0, step=1, limit=4
  $region2: #{club_forward.1} parent=0 // loop_pre_header
    _
  $region3: #{club_forward.1} parent=0 // loop_header
    %s16 = sphi 0, %s20
    %p17 = scmp.ge.s32.totalorder %s16, 4
    %s26 = sphi 0, %s28
    %s29 = sphi 0, %s26
    %s30 = sphi 0, %s29
    %s46 = sphi 0, %s30
    %s52 = sphi 0, %s54
    %s55 = sphi 0, %s52
    %s56 = sphi 0, %s55
    %s72 = sphi 0, %s56
    %s76 = sphi 0, %s76
    %s78 = sphi 0, %s76
    %s79 = sphi 0, %s78
    %s93 = sphi 0, %s79
    %s97 = sphi 0, %s97
    %s99 = sphi 0, %s97
    %s100 = sphi 0, %s99
    %s114 = sphi 0, %s100
    %s118 = sphi 0, %s118
    %s120 = sphi 0, %s118
    %s121 = sphi 0, %s120
    %s135 = sphi 0, %s121
    %s139 = sphi 0, %s139
    %s141 = sphi 0, %s139
    %s142 = sphi 0, %s141
    %s156 = sphi 0, %s142
    %s160 = sphi 0, %s160
    %s162 = sphi 0, %s160
    %s163 = sphi 0, %s162
    %s177 = sphi 0, %s163
    %s181 = sphi 0, %s181
    %s183 = sphi 0, %s181
    %s184 = sphi 0, %s183
    %s198 = sphi 0, %s184
    %s202 = sphi 0, %s202
    %s204 = sphi 0, %s202
    %s205 = sphi 0, %s204
    %s219 = sphi 0, %s205
    %s223 = sphi 0, %s223
    %s225 = sphi 0, %s223
    %s226 = sphi 0, %s225
    %s240 = sphi 0, %s226
    %s246 = sphi 0, %s248
    %s249 = sphi 0, %s246
    %s250 = sphi 0, %s249
    %s266 = sphi 0, %s250
  $region4: #{club_forward.1} parent=0 // loop_header_branch
    %19 = sbr.rel (%p17) target = $region8
  $region5: #{club_forward.1} parent=0 // loop_body
    %s21 = ssub.s32 %s16, 1
    %s22 = ssub.s32 %s16, 2
    %s23 = sadd.s32 %s16, 1
    %s24 = ssub.s32 %s16, %s23
    %p25 = scmp.eq.s32.totalorder %s24, 0
    %s27 = sadd.s32 %s26, 1
    %s28 = scalar_select %p25, %s26, %s27
    %p31 = pneg %p25
    %p32 = scmp.eq.s32.totalorder %s16, 1
    %p33 = por %p31, %p32
    %p34 = scmp.ne.s32.totalorder %s26, %s29
    %p35 = scmp.eq.s32.totalorder %s16, 0
    %p36 = por %p34, %p35
    %p37 = scmp.ne.s32.totalorder %s26, %s29
    %p38 = scmp.eq.s32.totalorder %s21, 1
    %p39 = por %p37, %p38
    %p40 = scmp.ne.s32.totalorder %s29, %s30
    %p41 = scmp.eq.s32.totalorder %s21, 0
    %p42 = por %p40, %p41
    %p43 = scmp.ne.s32.totalorder %s29, %s30
    %p44 = scmp.eq.s32.totalorder %s22, 1
    %p45 = por %p43, %p44
    %p47 = scmp.ne.s32.totalorder %s30, %s46
    %p48 = scmp.eq.s32.totalorder %s22, 0
    %p49 = por %p47, %p48
    %s50 = ssub.s32 %s16, %s23
    %p51 = scmp.eq.s32.totalorder %s50, 0
    %s53 = sadd.s32 %s52, 1
    %s54 = scalar_select %p51, %s52, %s53
    %p57 = pneg %p51
    %p58 = scmp.eq.s32.totalorder %s16, 1
    %p59 = por %p57, %p58
    %p60 = scmp.ne.s32.totalorder %s52, %s55
    %p61 = scmp.eq.s32.totalorder %s16, 0
    %p62 = por %p60, %p61
    %p63 = scmp.ne.s32.totalorder %s52, %s55
    %p64 = scmp.eq.s32.totalorder %s21, 1
    %p65 = por %p63, %p64
    %p66 = scmp.ne.s32.totalorder %s55, %s56
    %p67 = scmp.eq.s32.totalorder %s21, 0
    %p68 = por %p66, %p67
    %p69 = scmp.ne.s32.totalorder %s55, %s56
    %p70 = scmp.eq.s32.totalorder %s22, 1
    %p71 = por %p69, %p70
    %p73 = scmp.ne.s32.totalorder %s56, %s72
    %p74 = scmp.eq.s32.totalorder %s22, 0
    %p75 = por %p73, %p74
    %s77 = sadd.s32 %s76, 1
    %p80 = scmp.eq.s32.totalorder %s16, 1
    %p81 = scmp.ne.s32.totalorder %s76, %s78
    %p82 = scmp.eq.s32.totalorder %s16, 0
    %p83 = por %p81, %p82
    %p84 = scmp.ne.s32.totalorder %s76, %s78
    %p85 = scmp.eq.s32.totalorder %s21, 1
    %p86 = por %p84, %p85
    %p87 = scmp.ne.s32.totalorder %s78, %s79
    %p88 = scmp.eq.s32.totalorder %s21, 0
    %p89 = por %p87, %p88
    %p90 = scmp.ne.s32.totalorder %s78, %s79
    %p91 = scmp.eq.s32.totalorder %s22, 1
    %p92 = por %p90, %p91
    %p94 = scmp.ne.s32.totalorder %s79, %s93
    %p95 = scmp.eq.s32.totalorder %s22, 0
    %p96 = por %p94, %p95
    %s98 = sadd.s32 %s97, 1
    %p101 = scmp.eq.s32.totalorder %s16, 1
    %p102 = scmp.ne.s32.totalorder %s97, %s99
    %p103 = scmp.eq.s32.totalorder %s16, 0
    %p104 = por %p102, %p103
    %p105 = scmp.ne.s32.totalorder %s97, %s99
    %p106 = scmp.eq.s32.totalorder %s21, 1
    %p107 = por %p105, %p106
    %p108 = scmp.ne.s32.totalorder %s99, %s100
    %p109 = scmp.eq.s32.totalorder %s21, 0
    %p110 = por %p108, %p109
    %p111 = scmp.ne.s32.totalorder %s99, %s100
    %p112 = scmp.eq.s32.totalorder %s22, 1
    %p113 = por %p111, %p112
    %p115 = scmp.ne.s32.totalorder %s100, %s114
    %p116 = scmp.eq.s32.totalorder %s22, 0
    %p117 = por %p115, %p116
    %s119 = sadd.s32 %s118, 1
    %p122 = scmp.eq.s32.totalorder %s16, 1
    %p123 = scmp.ne.s32.totalorder %s118, %s120
    %p124 = scmp.eq.s32.totalorder %s16, 0
    %p125 = por %p123, %p124
    %p126 = scmp.ne.s32.totalorder %s118, %s120
    %p127 = scmp.eq.s32.totalorder %s21, 1
    %p128 = por %p126, %p127
    %p129 = scmp.ne.s32.totalorder %s120, %s121
    %p130 = scmp.eq.s32.totalorder %s21, 0
    %p131 = por %p129, %p130
    %p132 = scmp.ne.s32.totalorder %s120, %s121
    %p133 = scmp.eq.s32.totalorder %s22, 1
    %p134 = por %p132, %p133
    %p136 = scmp.ne.s32.totalorder %s121, %s135
    %p137 = scmp.eq.s32.totalorder %s22, 0
    %p138 = por %p136, %p137
    %s140 = sadd.s32 %s139, 1
    %p143 = scmp.eq.s32.totalorder %s16, 1
    %p144 = scmp.ne.s32.totalorder %s139, %s141
    %p145 = scmp.eq.s32.totalorder %s16, 0
    %p146 = por %p144, %p145
    %p147 = scmp.ne.s32.totalorder %s139, %s141
    %p148 = scmp.eq.s32.totalorder %s21, 1
    %p149 = por %p147, %p148
    %p150 = scmp.ne.s32.totalorder %s141, %s142
    %p151 = scmp.eq.s32.totalorder %s21, 0
    %p152 = por %p150, %p151
    %p153 = scmp.ne.s32.totalorder %s141, %s142
    %p154 = scmp.eq.s32.totalorder %s22, 1
    %p155 = por %p153, %p154
    %p157 = scmp.ne.s32.totalorder %s142, %s156
    %p158 = scmp.eq.s32.totalorder %s22, 0
    %p159 = por %p157, %p158
    %s161 = sadd.s32 %s160, 1
    %p164 = scmp.eq.s32.totalorder %s16, 1
    %p165 = scmp.ne.s32.totalorder %s160, %s162
    %p166 = scmp.eq.s32.totalorder %s16, 0
    %p167 = por %p165, %p166
    %p168 = scmp.ne.s32.totalorder %s160, %s162
    %p169 = scmp.eq.s32.totalorder %s21, 1
    %p170 = por %p168, %p169
    %p171 = scmp.ne.s32.totalorder %s162, %s163
    %p172 = scmp.eq.s32.totalorder %s21, 0
    %p173 = por %p171, %p172
    %p174 = scmp.ne.s32.totalorder %s162, %s163
    %p175 = scmp.eq.s32.totalorder %s22, 1
    %p176 = por %p174, %p175
    %p178 = scmp.ne.s32.totalorder %s163, %s177
    %p179 = scmp.eq.s32.totalorder %s22, 0
    %p180 = por %p178, %p179
    %s182 = sadd.s32 %s181, 1
    %p185 = scmp.eq.s32.totalorder %s16, 1
    %p186 = scmp.ne.s32.totalorder %s181, %s183
    %p187 = scmp.eq.s32.totalorder %s16, 0
    %p188 = por %p186, %p187
    %p189 = scmp.ne.s32.totalorder %s181, %s183
    %p190 = scmp.eq.s32.totalorder %s21, 1
    %p191 = por %p189, %p190
    %p192 = scmp.ne.s32.totalorder %s183, %s184
    %p193 = scmp.eq.s32.totalorder %s21, 0
    %p194 = por %p192, %p193
    %p195 = scmp.ne.s32.totalorder %s183, %s184
    %p196 = scmp.eq.s32.totalorder %s22, 1
    %p197 = por %p195, %p196
    %p199 = scmp.ne.s32.totalorder %s184, %s198
    %p200 = scmp.eq.s32.totalorder %s22, 0
    %p201 = por %p199, %p200
    %s203 = sadd.s32 %s202, 1
    %p206 = scmp.eq.s32.totalorder %s16, 1
    %p207 = scmp.ne.s32.totalorder %s202, %s204
    %p208 = scmp.eq.s32.totalorder %s16, 0
    %p209 = por %p207, %p208
    %p210 = scmp.ne.s32.totalorder %s202, %s204
    %p211 = scmp.eq.s32.totalorder %s21, 1
    %p212 = por %p210, %p211
    %p213 = scmp.ne.s32.totalorder %s204, %s205
    %p214 = scmp.eq.s32.totalorder %s21, 0
    %p215 = por %p213, %p214
    %p216 = scmp.ne.s32.totalorder %s204, %s205
    %p217 = scmp.eq.s32.totalorder %s22, 1
    %p218 = por %p216, %p217
    %p220 = scmp.ne.s32.totalorder %s205, %s219
    %p221 = scmp.eq.s32.totalorder %s22, 0
    %p222 = por %p220, %p221
    %s224 = sadd.s32 %s223, 1
    %p227 = scmp.eq.s32.totalorder %s16, 1
    %p228 = scmp.ne.s32.totalorder %s223, %s225
    %p229 = scmp.eq.s32.totalorder %s16, 0
    %p230 = por %p228, %p229
    %p231 = scmp.ne.s32.totalorder %s223, %s225
    %p232 = scmp.eq.s32.totalorder %s21, 1
    %p233 = por %p231, %p232
    %p234 = scmp.ne.s32.totalorder %s225, %s226
    %p235 = scmp.eq.s32.totalorder %s21, 0
    %p236 = por %p234, %p235
    %p237 = scmp.ne.s32.totalorder %s225, %s226
    %p238 = scmp.eq.s32.totalorder %s22, 1
    %p239 = por %p237, %p238
    %p241 = scmp.ne.s32.totalorder %s226, %s240
    %p242 = scmp.eq.s32.totalorder %s22, 0
    %p243 = por %p241, %p242
    %s244 = ssub.s32 %s16, %s23
    %p245 = scmp.eq.s32.totalorder %s244, 0
    %s247 = sadd.s32 %s246, 1
    %s248 = scalar_select %p245, %s246, %s247
    %p251 = pneg %p245
    %p252 = scmp.eq.s32.totalorder %s16, 1
    %p253 = por %p251, %p252
    %p254 = scmp.ne.s32.totalorder %s246, %s249
    %p255 = scmp.eq.s32.totalorder %s16, 0
    %p256 = por %p254, %p255
    %p257 = scmp.ne.s32.totalorder %s246, %s249
    %p258 = scmp.eq.s32.totalorder %s21, 1
    %p259 = por %p257, %p258
    %p260 = scmp.ne.s32.totalorder %s249, %s250
    %p261 = scmp.eq.s32.totalorder %s21, 0
    %p262 = por %p260, %p261
    %p263 = scmp.ne.s32.totalorder %s249, %s250
    %p264 = scmp.eq.s32.totalorder %s22, 1
    %p265 = por %p263, %p264
    %p267 = scmp.ne.s32.totalorder %s250, %s266
    %p268 = scmp.eq.s32.totalorder %s22, 0
    %p269 = por %p267, %p268
    %p270 = scmp.le.s32.totalorder 1, %s16
    %p271 = scmp.lt.s32.totalorder %s16, 3
    %p272 = pnand %p270, %p271
    %p273 = pneg %p272
    // Predicated region
    $region9: #{club_forward.1} parent=5 // pred_check
      _
    $region10: #{club_forward.1} parent=5 // pred_check_branch
      %275 = sbr.rel (%p272) target = $region12
    $region11: #{club_forward.1} parent=5 // pred_region
      %s276 = ssub.s32 %s16, 1
      // Predicated region
      $region13: #{club_forward.1} parent=11 // pred_check
        %p277 = pneg %p89
      $region14: #{club_forward.1} parent=11 // pred_check_branch
        %279 = sbr.rel (%p277) target = $region16
      $region15: #{club_forward.1} parent=11 // pred_region
        _
      $region16: #{club_forward.1} parent=11 // pred_fallthru
        _
      // Predicated region
      $region17: #{club_forward.1} parent=11 // pred_check
        %p280 = pneg %p110
      $region18: #{club_forward.1} parent=11 // pred_check_branch
        %282 = sbr.rel (%p280) target = $region20
      $region19: #{club_forward.1} parent=11 // pred_region
        _
      $region20: #{club_forward.1} parent=11 // pred_fallthru
        _
      // Predicated region
      $region21: #{club_forward.1} parent=11 // pred_check
        %p283 = pneg %p131
      $region22: #{club_forward.1} parent=11 // pred_check_branch
        %285 = sbr.rel (%p283) target = $region24
      $region23: #{club_forward.1} parent=11 // pred_region
        _
      $region24: #{club_forward.1} parent=11 // pred_fallthru
        _
      // Predicated region
      $region25: #{club_forward.1} parent=11 // pred_check
        %p286 = pneg %p152
      $region26: #{club_forward.1} parent=11 // pred_check_branch
        %288 = sbr.rel (%p286) target = $region28
      $region27: #{club_forward.1} parent=11 // pred_region
        _
      $region28: #{club_forward.1} parent=11 // pred_fallthru
        _
      // Predicated region
      $region29: #{club_forward.1} parent=11 // pred_check
        %p289 = pneg %p173
      $region30: #{club_forward.1} parent=11 // pred_check_branch
        %291 = sbr.rel (%p289) target = $region32
      $region31: #{club_forward.1} parent=11 // pred_region
        _
      $region32: #{club_forward.1} parent=11 // pred_fallthru
        _
      // Predicated region
      $region33: #{club_forward.1} parent=11 // pred_check
        %p292 = pneg %p194
      $region34: #{club_forward.1} parent=11 // pred_check_branch
        %294 = sbr.rel (%p292) target = $region36
      $region35: #{club_forward.1} parent=11 // pred_region
        _
      $region36: #{club_forward.1} parent=11 // pred_fallthru
        _
      // Predicated region
      $region37: #{club_forward.1} parent=11 // pred_check
        %p295 = pneg %p215
      $region38: #{club_forward.1} parent=11 // pred_check_branch
        %297 = sbr.rel (%p295) target = $region40
      $region39: #{club_forward.1} parent=11 // pred_region
        _
      $region40: #{club_forward.1} parent=11 // pred_fallthru
        _
      // Predicated region
      $region41: #{club_forward.1} parent=11 // pred_check
        %p298 = pneg %p236
      $region42: #{club_forward.1} parent=11 // pred_check_branch
        %300 = sbr.rel (%p298) target = $region44
      $region43: #{club_forward.1} parent=11 // pred_region
        _
      $region44: #{club_forward.1} parent=11 // pred_fallthru
        _
    $region12: #{club_forward.1} parent=5 // pred_fallthru
      _
    %p301 = scmp.lt.s32.totalorder %s16, 2
    // Predicated region
    $region45: #{club_forward.1} parent=5 // pred_check
      %p302 = pneg %p301
    $region46: #{club_forward.1} parent=5 // pred_check_branch
      %304 = sbr.rel (%p302) target = $region48
    $region47: #{club_forward.1} parent=5 // pred_region
      // Predicated region
      $region49: #{club_forward.1} parent=47 // pred_check
        %p305 = pneg %p36
      $region50: #{club_forward.1} parent=47 // pred_check_branch
        %307 = sbr.rel (%p305) target = $region52
      $region51: #{club_forward.1} parent=47 // pred_region
        %s308 = smul.u32 32, %s16
        %p309 = scmp.lt.s32.totalorder %s308, 63
        %s310 = scalar_select %p309, %s308, 63
        %s311 = smul.addr %s310, 8
        %s312 = scalar_lea.vmem %s0, %s311
        %s313 = smul.u32 32, %s16
      $region52: #{club_forward.1} parent=47 // pred_fallthru
        _
      // Predicated region
      $region53: #{club_forward.1} parent=47 // pred_check
        %p314 = pneg %p62
      $region54: #{club_forward.1} parent=47 // pred_check_branch
        %316 = sbr.rel (%p314) target = $region56
      $region55: #{club_forward.1} parent=47 // pred_region
        %s317 = smul.u32 32, %s16
        %p318 = scmp.lt.s32.totalorder %s317, 63
        %s319 = scalar_select %p318, %s317, 63
        %s320 = smul.addr %s319, 8
        %s321 = scalar_lea.vmem %s1, %s320
        %s322 = smul.u32 32, %s16
      $region56: #{club_forward.1} parent=47 // pred_fallthru
        _
    $region48: #{club_forward.1} parent=5 // pred_fallthru
      _
    %p323 = scmp.le.s32.totalorder 1, %s16
    %p324 = scmp.lt.s32.totalorder %s16, 3
    %p325 = pnand %p323, %p324
    %p326 = pneg %p325
    // Predicated region
    $region57: #{club_forward.1} parent=5 // pred_check
      _
    $region58: #{club_forward.1} parent=5 // pred_check_branch
      %328 = sbr.rel (%p325) target = $region60
    $region59: #{club_forward.1} parent=5 // pred_region
      %s329 = ssub.s32 %s16, 1
      %s330 = smul.u32 32, %s21
      %p331 = scmp.lt.s32.totalorder %s330, 63
      %s332 = scalar_select %p331, %s330, 63
      %s333 = smul.addr %s332, 8
      %s334 = scalar_lea.vmem %s0, %s333
      %p335 = pneg %p42
      %p336 = pneg %p39
      %s337 = smul.u32 32, %s21
      %p338 = scmp.lt.s32.totalorder %s337, 63
      %s339 = scalar_select %p338, %s337, 63
      %s340 = smul.addr %s339, 8
      %s341 = scalar_lea.vmem %s1, %s340
      %p342 = pneg %p68
      %p343 = pneg %p65
      %p344 = pneg %p89
      %p345 = pneg %p86
      %p346 = pneg %p110
      %p347 = pneg %p107
      %p348 = pneg %p131
      %p349 = pneg %p128
      %p350 = pneg %p152
      %p351 = pneg %p149
      %p352 = pneg %p173
      %p353 = pneg %p170
      %p354 = pneg %p194
      %p355 = pneg %p191
      %p356 = pneg %p215
      %p357 = pneg %p212
      %p358 = pneg %p236
      %p359 = pneg %p233
      %p360 = pneg %p262
      %p361 = pneg %p259
      %s362 = smul.u32 32, %s21
      %p363 = scmp.lt.s32.totalorder %s362, 63
      %s364 = scalar_select %p363, %s362, 63
      %s365 = smul.addr %s364, 8
      %s366 = scalar_lea.vmem %s10, %s365
      %s367 = smul.u32 32, %s21
      %p368 = scmp.lt.s32.totalorder %s367, 63
      %s369 = scalar_select %p368, %s367, 63
      %s370 = smul.addr %s369, 8
      %s371 = scalar_lea.vmem %s0, %s370
      %s372 = smul.u32 32, %s21
      %s373 = smul.u32 32, %s21
      %p374 = scmp.lt.s32.totalorder %s373, 63
      %s375 = scalar_select %p374, %s373, 63
      %s376 = smul.addr %s375, 8
      %s377 = scalar_lea.vmem %s1, %s376
      %s378 = smul.u32 32, %s21
      %s379 = smul.u32 32, %s21
      %p380 = scmp.lt.s32.totalorder %s379, 63
      %s381 = scalar_select %p380, %s379, 63
      %s382 = smul.addr %s381, 8
      %s383 = scalar_lea.vmem %s10, %s382
      %s384 = smul.u32 32, %s21
      %v385 = vld [vmem:[%s371] sm:$0xff]
      %v386 = vld [vmem:[%s371 + $0x8] sm:$0xff]
      %v387 = vld [vmem:[%s371 + $0x10] sm:$0xff]
      %v388 = vld [vmem:[%s371 + $0x18] sm:$0xff]
      %v389 = vld [vmem:[%s371 + $0x20] sm:$0xff]
      %v390 = vld [vmem:[%s371 + $0x28] sm:$0xff]
      %v391 = vld [vmem:[%s371 + $0x30] sm:$0xff]
      %v392 = vld [vmem:[%s371 + $0x38] sm:$0xff]
      %v393 = vld [vmem:[%s371 + $0x40] sm:$0xff]
      %v394 = vld [vmem:[%s371 + $0x48] sm:$0xff]
      %v395 = vld [vmem:[%s371 + $0x50] sm:$0xff]
      %v396 = vld [vmem:[%s371 + $0x58] sm:$0xff]
      %v397 = vld [vmem:[%s371 + $0x60] sm:$0xff]
      %v398 = vld [vmem:[%s371 + $0x68] sm:$0xff]
      %v399 = vld [vmem:[%s371 + $0x70] sm:$0xff]
      %v400 = vld [vmem:[%s371 + $0x78] sm:$0xff]
      %v401 = vld [vmem:[%s371 + $0x80] sm:$0xff]
      %v402 = vld [vmem:[%s371 + $0x88] sm:$0xff]
      %v403 = vld [vmem:[%s371 + $0x90] sm:$0xff]
      %v404 = vld [vmem:[%s371 + $0x98] sm:$0xff]
      %v405 = vld [vmem:[%s371 + $0xa0] sm:$0xff]
      %v406 = vld [vmem:[%s371 + $0xa8] sm:$0xff]
      %v407 = vld [vmem:[%s371 + $0xb0] sm:$0xff]
      %v408 = vld [vmem:[%s371 + $0xb8] sm:$0xff]
      %v409 = vld [vmem:[%s371 + $0xc0] sm:$0xff]
      %v410 = vld [vmem:[%s371 + $0xc8] sm:$0xff]
      %v411 = vld [vmem:[%s371 + $0xd0] sm:$0xff]
      %v412 = vld [vmem:[%s371 + $0xd8] sm:$0xff]
      %v413 = vld [vmem:[%s371 + $0xe0] sm:$0xff]
      %v414 = vld [vmem:[%s371 + $0xe8] sm:$0xff]
      %v415 = vld [vmem:[%s371 + $0xf0] sm:$0xff]
      %v416 = vld [vmem:[%s371 + $0xf8] sm:$0xff]
      %v417 = vld [vmem:[%s377] sm:$0xff]
      %v418 = vld [vmem:[%s377 + $0x8] sm:$0xff]
      %v419 = vld [vmem:[%s377 + $0x10] sm:$0xff]
      %v420 = vld [vmem:[%s377 + $0x18] sm:$0xff]
      %v421 = vld [vmem:[%s377 + $0x20] sm:$0xff]
      %v422 = vld [vmem:[%s377 + $0x28] sm:$0xff]
      %v423 = vld [vmem:[%s377 + $0x30] sm:$0xff]
      %v424 = vld [vmem:[%s377 + $0x38] sm:$0xff]
      %v425 = vld [vmem:[%s377 + $0x40] sm:$0xff]
      %v426 = vld [vmem:[%s377 + $0x48] sm:$0xff]
      %v427 = vld [vmem:[%s377 + $0x50] sm:$0xff]
      %v428 = vld [vmem:[%s377 + $0x58] sm:$0xff]
      %v429 = vld [vmem:[%s377 + $0x60] sm:$0xff]
      %v430 = vld [vmem:[%s377 + $0x68] sm:$0xff]
      %v431 = vld [vmem:[%s377 + $0x70] sm:$0xff]
      %v432 = vld [vmem:[%s377 + $0x78] sm:$0xff]
      %v433 = vld [vmem:[%s377 + $0x80] sm:$0xff]
      %v434 = vld [vmem:[%s377 + $0x88] sm:$0xff]
      %v435 = vld [vmem:[%s377 + $0x90] sm:$0xff]
      %v436 = vld [vmem:[%s377 + $0x98] sm:$0xff]
      %v437 = vld [vmem:[%s377 + $0xa0] sm:$0xff]
      %v438 = vld [vmem:[%s377 + $0xa8] sm:$0xff]
      %v439 = vld [vmem:[%s377 + $0xb0] sm:$0xff]
      %v440 = vld [vmem:[%s377 + $0xb8] sm:$0xff]
      %v441 = vld [vmem:[%s377 + $0xc0] sm:$0xff]
      %v442 = vld [vmem:[%s377 + $0xc8] sm:$0xff]
      %v443 = vld [vmem:[%s377 + $0xd0] sm:$0xff]
      %v444 = vld [vmem:[%s377 + $0xd8] sm:$0xff]
      %v445 = vld [vmem:[%s377 + $0xe0] sm:$0xff]
      %v446 = vld [vmem:[%s377 + $0xe8] sm:$0xff]
      %v447 = vld [vmem:[%s377 + $0xf0] sm:$0xff]
      %v448 = vld [vmem:[%s377 + $0xf8] sm:$0xff]
      %v449 = vld [vmem:[%s2] sm:$0xff]
      %v450 = vld [vmem:[%s2 + $0x8] sm:$0xff]
      %v451 = vld [vmem:[%s2 + $0x10] sm:$0xff]
      %v452 = vld [vmem:[%s2 + $0x18] sm:$0xff]
      %v453 = vld [vmem:[%s4] sm:$0xff]
      %v454 = vld [vmem:[%s4 + $0x8] sm:$0xff]
      %v455 = vld [vmem:[%s4 + $0x10] sm:$0xff]
      %v456 = vld [vmem:[%s4 + $0x18] sm:$0xff]
      %v457 = vld [vmem:[%s4 + $0x20] sm:$0xff]
      %v458 = vld [vmem:[%s4 + $0x28] sm:$0xff]
      %v459 = vld [vmem:[%s4 + $0x30] sm:$0xff]
      %v460 = vld [vmem:[%s4 + $0x38] sm:$0xff]
      %v461 = vld [vmem:[%s6] sm:$0xff]
      %v462 = vld [vmem:[%s6 + $0x8] sm:$0xff]
      %v463 = vld [vmem:[%s6 + $0x10] sm:$0xff]
      %v464 = vld [vmem:[%s6 + $0x18] sm:$0xff]
      %v465 = vld [vmem:[%s6 + $0x20] sm:$0xff]
      %v466 = vld [vmem:[%s6 + $0x28] sm:$0xff]
      %v467 = vld [vmem:[%s6 + $0x30] sm:$0xff]
      %v468 = vld [vmem:[%s6 + $0x38] sm:$0xff]
      %v469 = vld [vmem:[%s3] sm:$0x1]
      %v471 = vlaneseq
      %v472 = vshrl.u32 %v471, 7
      %v473 = vsub.s32 0, %v472
      %v474 = vrot.slane %v469, %v473
      %vm476 = vcmask 261120
      %v478 = vsel %vm476, %v385, 0
      %v481 = vsel %vm476, %v386, 0
      %v484 = vsel %vm476, %v387, 0
      %v487 = vsel %vm476, %v388, 0
      %v490 = vsel %vm476, %v389, 0
      %v493 = vsel %vm476, %v390, 0
      %v496 = vsel %vm476, %v391, 0
      %v499 = vsel %vm476, %v392, 0
      %v502 = vsel %vm476, %v393, 0
      %v505 = vsel %vm476, %v394, 0
      %v508 = vsel %vm476, %v395, 0
      %v511 = vsel %vm476, %v396, 0
      %v514 = vsel %vm476, %v397, 0
      %v517 = vsel %vm476, %v398, 0
      %v520 = vsel %vm476, %v399, 0
      %v523 = vsel %vm476, %v400, 0
      %v526 = vsel %vm476, %v401, 0
      %v529 = vsel %vm476, %v402, 0
      %v532 = vsel %vm476, %v403, 0
      %v535 = vsel %vm476, %v404, 0
      %v538 = vsel %vm476, %v405, 0
      %v541 = vsel %vm476, %v406, 0
      %v544 = vsel %vm476, %v407, 0
      %v547 = vsel %vm476, %v408, 0
      %v550 = vsel %vm476, %v409, 0
      %v553 = vsel %vm476, %v410, 0
      %v556 = vsel %vm476, %v411, 0
      %v559 = vsel %vm476, %v412, 0
      %v562 = vsel %vm476, %v413, 0
      %v565 = vsel %vm476, %v414, 0
      %v568 = vsel %vm476, %v415, 0
      %v571 = vsel %vm476, %v416, 0
      %573 = vmatprep.subr.mxu0 0.0
      %574 = vmatpush1.msra.mxu0 %v449
      %575 = vmatprep.subr.mxu0 0.0
      %576 = vmatpush1.msra.mxu0 %v450
      %577 = vmatprep.subr.mxu0 0.0
      %578 = vmatpush1.msra.mxu0 %v451
      %579 = vmatprep.subr.mxu0 0.0
      %580 = vmatpush1.msra.mxu0 %v452
      %581 = vmatprep.subr.mxu0 0.0
      %582 = vmatpush1.msra.mxu0 0.0
      %583 = vmatprep.subr.mxu0 0.0
      %584 = vmatpush1.msra.mxu0 0.0
      %585 = vmatprep.subr.mxu0 0.0
      %586 = vmatpush1.msra.mxu0 0.0
      %587 = vmatprep.subr.mxu0 0.0
      %588 = vmatpush1.msra.mxu0 0.0
      %589 = vmatprep.subr.mxu0 0.0
      %590 = vmatpush1.msra.mxu0 0.0
      %591 = vmatprep.subr.mxu0 0.0
      %592 = vmatpush1.msra.mxu0 0.0
      %593 = vmatprep.subr.mxu0 0.0
      %594 = vmatpush1.msra.mxu0 0.0
      %595 = vmatprep.subr.mxu0 0.0
      %596 = vmatpush1.msra.mxu0 0.0
      %597 = vmatprep.subr.mxu0 0.0
      %598 = vmatpush1.msra.mxu0 0.0
      %599 = vmatprep.subr.mxu0 0.0
      %600 = vmatpush1.msra.mxu0 0.0
      %601 = vmatprep.subr.mxu0 0.0
      %602 = vmatpush1.msra.mxu0 0.0
      %603 = vmatprep.subr.mxu0 0.0
      %604 = vmatpush1.msra.mxu0 0.0
      %605 = vmatprep.subr.mxu0 0.0
      %606 = vmatpush1.msra.mxu0 0.0
      %607 = vmatprep.subr.mxu0 0.0
      %608 = vmatpush1.msra.mxu0 0.0
      %609 = vmatprep.subr.mxu0 0.0
      %610 = vmatpush1.msra.mxu0 0.0
      %611 = vmatprep.subr.mxu0 0.0
      %612 = vmatpush1.msra.mxu0 0.0
      %613 = vmatprep.subr.mxu0 0.0
      %614 = vmatpush1.msra.mxu0 0.0
      %615 = vmatprep.subr.mxu0 0.0
      %616 = vmatpush1.msra.mxu0 0.0
      %617 = vmatprep.subr.mxu0 0.0
      %618 = vmatpush1.msra.mxu0 0.0
      %619 = vmatprep.subr.mxu0 0.0
      %620 = vmatpush1.msra.mxu0 0.0
      %621 = vmatprep.subr.mxu0 0.0
      %622 = vmatpush1.msra.mxu0 0.0
      %623 = vmatprep.subr.mxu0 0.0
      %624 = vmatpush1.msra.mxu0 0.0
      %625 = vmatprep.subr.mxu0 0.0
      %626 = vmatpush1.msra.mxu0 0.0
      %627 = vmatprep.subr.mxu0 0.0
      %628 = vmatpush1.msra.mxu0 0.0
      %629 = vmatprep.subr.mxu0 0.0
      %630 = vmatpush1.msra.mxu0 0.0
      %631 = vmatprep.subr.mxu0 0.0
      %632 = vmatpush1.msra.mxu0 0.0
      %633 = vmatprep.subr.mxu0 0.0
      %634 = vmatpush1.msra.mxu0 0.0
      %635 = vmatprep.subr.mxu0 0.0
      %636 = vmatpush1.msra.mxu0 0.0
      %637 = vmatprep.mubr.f32.mxu0 0.0
      %638 = vmatmul.mubr.f32.gmra.mrb[0].mxu0 %v478
      %v639 = vpop.f32.mrb[0].mxu0
      %v640 = vadd.f32 %v474, %v639
      %v641 = vpop.f32.mrb[0].mxu0
      %642 = vmatprep.mubr.f32.mxu0 0.0
      %643 = vmatmul.mubr.f32.gmra.mrb[0].mxu0 %v481
      %v644 = vpop.f32.mrb[0].mxu0
      %v645 = vadd.f32 %v474, %v644
      %v646 = vpop.f32.mrb[0].mxu0
      %647 = vmatprep.mubr.f32.mxu0 0.0
      %648 = vmatmul.mubr.f32.gmra.mrb[0].mxu0 %v484
      %v649 = vpop.f32.mrb[0].mxu0
      %v650 = vadd.f32 %v474, %v649
      %v651 = vpop.f32.mrb[0].mxu0
      %652 = vmatprep.mubr.f32.mxu0 0.0
      %653 = vmatmul.mubr.f32.gmra.mrb[0].mxu0 %v487
      %v654 = vpop.f32.mrb[0].mxu0
      %v655 = vadd.f32 %v474, %v654
      %v656 = vpop.f32.mrb[0].mxu0
      %657 = vmatprep.mubr.f32.mxu0 0.0
      %658 = vmatmul.mubr.f32.gmra.mrb[0].mxu0 %v490
      %v659 = vpop.f32.mrb[0].mxu0
      %v660 = vadd.f32 %v474, %v659
      %v661 = vpop.f32.mrb[0].mxu0
      %662 = vmatprep.mubr.f32.mxu0 0.0
      %663 = vmatmul.mubr.f32.gmra.mrb[0].mxu0 %v493
      %v664 = vpop.f32.mrb[0].mxu0
      %v665 = vadd.f32 %v474, %v664
      %v666 = vpop.f32.mrb[0].mxu0
      %667 = vmatprep.mubr.f32.mxu0 0.0
      %668 = vmatmul.mubr.f32.gmra.mrb[0].mxu0 %v496
      %v669 = vpop.f32.mrb[0].mxu0
      %v670 = vadd.f32 %v474, %v669
      %v671 = vpop.f32.mrb[0].mxu0
      %672 = vmatprep.mubr.f32.mxu0 0.0
      %673 = vmatmul.mubr.f32.gmra.mrb[0].mxu0 %v499
      %v674 = vpop.f32.mrb[0].mxu0
      %v675 = vadd.f32 %v474, %v674
      %v676 = vpop.f32.mrb[0].mxu0
      %677 = vmatprep.mubr.f32.mxu0 0.0
      %678 = vmatmul.mubr.f32.gmra.mrb[0].mxu0 %v502
      %v679 = vpop.f32.mrb[0].mxu0
      %v680 = vadd.f32 %v474, %v679
      %v681 = vpop.f32.mrb[0].mxu0
      %682 = vmatprep.mubr.f32.mxu0 0.0
      %683 = vmatmul.mubr.f32.gmra.mrb[0].mxu0 %v505
      %v684 = vpop.f32.mrb[0].mxu0
      %v685 = vadd.f32 %v474, %v684
      %v686 = vpop.f32.mrb[0].mxu0
      %687 = vmatprep.mubr.f32.mxu0 0.0
      %688 = vmatmul.mubr.f32.gmra.mrb[0].mxu0 %v508
      %v689 = vpop.f32.mrb[0].mxu0
      %v690 = vadd.f32 %v474, %v689
      %v691 = vpop.f32.mrb[0].mxu0
      %692 = vmatprep.mubr.f32.mxu0 0.0
      %693 = vmatmul.mubr.f32.gmra.mrb[0].mxu0 %v511
      %v694 = vpop.f32.mrb[0].mxu0
      %v695 = vadd.f32 %v474, %v694
      %v696 = vpop.f32.mrb[0].mxu0
      %697 = vmatprep.mubr.f32.mxu0 0.0
      %698 = vmatmul.mubr.f32.gmra.mrb[0].mxu0 %v514
      %v699 = vpop.f32.mrb[0].mxu0
      %v700 = vadd.f32 %v474, %v699
      %v701 = vpop.f32.mrb[0].mxu0
      %702 = vmatprep.mubr.f32.mxu0 0.0
      %703 = vmatmul.mubr.f32.gmra.mrb[0].mxu0 %v517
      %v704 = vpop.f32.mrb[0].mxu0
      %v705 = vadd.f32 %v474, %v704
      %v706 = vpop.f32.mrb[0].mxu0
      %707 = vmatprep.mubr.f32.mxu0 0.0
      %708 = vmatmul.mubr.f32.gmra.mrb[0].mxu0 %v520
      %v709 = vpop.f32.mrb[0].mxu0
      %v710 = vadd.f32 %v474, %v709
      %v711 = vpop.f32.mrb[0].mxu0
      %712 = vmatprep.mubr.f32.mxu0 0.0
      %713 = vmatmul.mubr.f32.gmra.mrb[0].mxu0 %v523
      %v714 = vpop.f32.mrb[0].mxu0
      %v715 = vadd.f32 %v474, %v714
      %v716 = vpop.f32.mrb[0].mxu0
      %717 = vmatprep.mubr.f32.mxu0 0.0
      %718 = vmatmul.mubr.f32.gmra.mrb[0].mxu0 %v526
      %v719 = vpop.f32.mrb[0].mxu0
      %v720 = vadd.f32 %v474, %v719
      %v721 = vpop.f32.mrb[0].mxu0
      %722 = vmatprep.mubr.f32.mxu0 0.0
      %723 = vmatmul.mubr.f32.gmra.mrb[0].mxu0 %v529
      %v724 = vpop.f32.mrb[0].mxu0
      %v725 = vadd.f32 %v474, %v724
      %v726 = vpop.f32.mrb[0].mxu0
      %727 = vmatprep.mubr.f32.mxu0 0.0
      %728 = vmatmul.mubr.f32.gmra.mrb[0].mxu0 %v532
      %v729 = vpop.f32.mrb[0].mxu0
      %v730 = vadd.f32 %v474, %v729
      %v731 = vpop.f32.mrb[0].mxu0
      %732 = vmatprep.mubr.f32.mxu0 0.0
      %733 = vmatmul.mubr.f32.gmra.mrb[0].mxu0 %v535
      %v734 = vpop.f32.mrb[0].mxu0
      %v735 = vadd.f32 %v474, %v734
      %v736 = vpop.f32.mrb[0].mxu0
      %737 = vmatprep.mubr.f32.mxu0 0.0
      %738 = vmatmul.mubr.f32.gmra.mrb[0].mxu0 %v538
      %v739 = vpop.f32.mrb[0].mxu0
      %v740 = vadd.f32 %v474, %v739
      %v741 = vpop.f32.mrb[0].mxu0
      %742 = vmatprep.mubr.f32.mxu0 0.0
      %743 = vmatmul.mubr.f32.gmra.mrb[0].mxu0 %v541
      %v744 = vpop.f32.mrb[0].mxu0
      %v745 = vadd.f32 %v474, %v744
      %v746 = vpop.f32.mrb[0].mxu0
      %747 = vmatprep.mubr.f32.mxu0 0.0
      %748 = vmatmul.mubr.f32.gmra.mrb[0].mxu0 %v544
      %v749 = vpop.f32.mrb[0].mxu0
      %v750 = vadd.f32 %v474, %v749
      %v751 = vpop.f32.mrb[0].mxu0
      %752 = vmatprep.mubr.f32.mxu0 0.0
      %753 = vmatmul.mubr.f32.gmra.mrb[0].mxu0 %v547
      %v754 = vpop.f32.mrb[0].mxu0
      %v755 = vadd.f32 %v474, %v754
      %v756 = vpop.f32.mrb[0].mxu0
      %757 = vmatprep.mubr.f32.mxu0 0.0
      %758 = vmatmul.mubr.f32.gmra.mrb[0].mxu0 %v550
      %v759 = vpop.f32.mrb[0].mxu0
      %v760 = vadd.f32 %v474, %v759
      %v761 = vpop.f32.mrb[0].mxu0
      %762 = vmatprep.mubr.f32.mxu0 0.0
      %763 = vmatmul.mubr.f32.gmra.mrb[0].mxu0 %v553
      %v764 = vpop.f32.mrb[0].mxu0
      %v765 = vadd.f32 %v474, %v764
      %v766 = vpop.f32.mrb[0].mxu0
      %767 = vmatprep.mubr.f32.mxu0 0.0
      %768 = vmatmul.mubr.f32.gmra.mrb[0].mxu0 %v556
      %v769 = vpop.f32.mrb[0].mxu0
      %v770 = vadd.f32 %v474, %v769
      %v771 = vpop.f32.mrb[0].mxu0
      %772 = vmatprep.mubr.f32.mxu0 0.0
      %773 = vmatmul.mubr.f32.gmra.mrb[0].mxu0 %v559
      %v774 = vpop.f32.mrb[0].mxu0
      %v775 = vadd.f32 %v474, %v774
      %v776 = vpop.f32.mrb[0].mxu0
      %777 = vmatprep.mubr.f32.mxu0 0.0
      %778 = vmatmul.mubr.f32.gmra.mrb[0].mxu0 %v562
      %v779 = vpop.f32.mrb[0].mxu0
      %v780 = vadd.f32 %v474, %v779
      %v781 = vpop.f32.mrb[0].mxu0
      %782 = vmatprep.mubr.f32.mxu0 0.0
      %783 = vmatmul.mubr.f32.gmra.mrb[0].mxu0 %v565
      %v784 = vpop.f32.mrb[0].mxu0
      %v785 = vadd.f32 %v474, %v784
      %v786 = vpop.f32.mrb[0].mxu0
      %787 = vmatprep.mubr.f32.mxu0 0.0
      %788 = vmatmul.mubr.f32.gmra.mrb[0].mxu0 %v568
      %v789 = vpop.f32.mrb[0].mxu0
      %v790 = vadd.f32 %v474, %v789
      %v791 = vpop.f32.mrb[0].mxu0
      %792 = vmatprep.mubr.f32.mxu0 0.0
      %793 = vmatmul.mubr.f32.gmra.mrb[0].mxu0 %v571
      %v794 = vpop.f32.mrb[0].mxu0
      %v795 = vadd.f32 %v474, %v794
      %v796 = vpop.f32.mrb[0].mxu0
      %797 = vdwg.mxu0
      %v798 = vmax.f32 %v640, 0.0
      %v799 = vmax.f32 %v645, 0.0
      %v800 = vmax.f32 %v650, 0.0
      %v801 = vmax.f32 %v655, 0.0
      %v802 = vmax.f32 %v660, 0.0
      %v803 = vmax.f32 %v665, 0.0
      %v804 = vmax.f32 %v670, 0.0
      %v805 = vmax.f32 %v675, 0.0
      %v806 = vmax.f32 %v680, 0.0
      %v807 = vmax.f32 %v685, 0.0
      %v808 = vmax.f32 %v690, 0.0
      %v809 = vmax.f32 %v695, 0.0
      %v810 = vmax.f32 %v700, 0.0
      %v811 = vmax.f32 %v705, 0.0
      %v812 = vmax.f32 %v710, 0.0
      %v813 = vmax.f32 %v715, 0.0
      %v814 = vmax.f32 %v720, 0.0
      %v815 = vmax.f32 %v725, 0.0
      %v816 = vmax.f32 %v730, 0.0
      %v817 = vmax.f32 %v735, 0.0
      %v818 = vmax.f32 %v740, 0.0
      %v819 = vmax.f32 %v745, 0.0
      %v820 = vmax.f32 %v750, 0.0
      %v821 = vmax.f32 %v755, 0.0
      %v822 = vmax.f32 %v760, 0.0
      %v823 = vmax.f32 %v765, 0.0
      %v824 = vmax.f32 %v770, 0.0
      %v825 = vmax.f32 %v775, 0.0
      %v826 = vmax.f32 %v780, 0.0
      %v827 = vmax.f32 %v785, 0.0
      %v828 = vmax.f32 %v790, 0.0
      %v829 = vmax.f32 %v795, 0.0
      %v830 = vld [vmem:[%s5] sm:$0x1]
      %v832 = vlaneseq
      %v833 = vshrl.u32 %v832, 7
      %v834 = vsub.s32 0, %v833
      %v835 = vrot.slane %v830, %v834
      %vm837 = vcmask 523264
      %v839 = vsel %vm837, %v798, 0
      %v842 = vsel %vm837, %v799, 0
      %v845 = vsel %vm837, %v800, 0
      %v848 = vsel %vm837, %v801, 0
      %v851 = vsel %vm837, %v802, 0
      %v854 = vsel %vm837, %v803, 0
      %v857 = vsel %vm837, %v804, 0
      %v860 = vsel %vm837, %v805, 0
      %v863 = vsel %vm837, %v806, 0
      %v866 = vsel %vm837, %v807, 0
      %v869 = vsel %vm837, %v808, 0
      %v872 = vsel %vm837, %v809, 0
      %v875 = vsel %vm837, %v810, 0
      %v878 = vsel %vm837, %v811, 0
      %v881 = vsel %vm837, %v812, 0
      %v884 = vsel %vm837, %v813, 0
      %v887 = vsel %vm837, %v814, 0
      %v890 = vsel %vm837, %v815, 0
      %v893 = vsel %vm837, %v816, 0
      %v896 = vsel %vm837, %v817, 0
      %v899 = vsel %vm837, %v818, 0
      %v902 = vsel %vm837, %v819, 0
      %v905 = vsel %vm837, %v820, 0
      %v908 = vsel %vm837, %v821, 0
      %v911 = vsel %vm837, %v822, 0
      %v914 = vsel %vm837, %v823, 0
      %v917 = vsel %vm837, %v824, 0
      %v920 = vsel %vm837, %v825, 0
      %v923 = vsel %vm837, %v826, 0
      %v926 = vsel %vm837, %v827, 0
      %v929 = vsel %vm837, %v828, 0
      %v932 = vsel %vm837, %v829, 0
      %934 = vmatprep.subr.mxu0 0.0
      %935 = vmatpush1.msra.mxu0 %v453
      %936 = vmatprep.subr.mxu0 0.0
      %937 = vmatpush1.msra.mxu0 %v454
      %938 = vmatprep.subr.mxu0 0.0
      %939 = vmatpush1.msra.mxu0 %v455
      %940 = vmatprep.subr.mxu0 0.0
      %941 = vmatpush1.msra.mxu0 %v456
      %942 = vmatprep.subr.mxu0 0.0
      %943 = vmatpush1.msra.mxu0 %v457
      %944 = vmatprep.subr.mxu0 0.0
      %945 = vmatpush1.msra.mxu0 %v458
      %946 = vmatprep.subr.mxu0 0.0
      %947 = vmatpush1.msra.mxu0 %v459
      %948 = vmatprep.subr.mxu0 0.0
      %949 = vmatpush1.msra.mxu0 %v460
      %950 = vmatprep.subr.mxu0 0.0
      %951 = vmatpush1.msra.mxu0 0.0
      %952 = vmatprep.subr.mxu0 0.0
      %953 = vmatpush1.msra.mxu0 0.0
      %954 = vmatprep.subr.mxu0 0.0
      %955 = vmatpush1.msra.mxu0 0.0
      %956 = vmatprep.subr.mxu0 0.0
      %957 = vmatpush1.msra.mxu0 0.0
      %958 = vmatprep.subr.mxu0 0.0
      %959 = vmatpush1.msra.mxu0 0.0
      %960 = vmatprep.subr.mxu0 0.0
      %961 = vmatpush1.msra.mxu0 0.0
      %962 = vmatprep.subr.mxu0 0.0
      %963 = vmatpush1.msra.mxu0 0.0
      %964 = vmatprep.subr.mxu0 0.0
      %965 = vmatpush1.msra.mxu0 0.0
      %966 = vmatprep.subr.mxu0 0.0
      %967 = vmatpush1.msra.mxu0 0.0
      %968 = vmatprep.subr.mxu0 0.0
      %969 = vmatpush1.msra.mxu0 0.0
      %970 = vmatprep.subr.mxu0 0.0
      %971 = vmatpush1.msra.mxu0 0.0
      %972 = vmatprep.subr.mxu0 0.0
      %973 = vmatpush1.msra.mxu0 0.0
      %974 = vmatprep.subr.mxu0 0.0
      %975 = vmatpush1.msra.mxu0 0.0
      %976 = vmatprep.subr.mxu0 0.0
      %977 = vmatpush1.msra.mxu0 0.0
      %978 = vmatprep.subr.mxu0 0.0
      %979 = vmatpush1.msra.mxu0 0.0
      %980 = vmatprep.subr.mxu0 0.0
      %981 = vmatpush1.msra.mxu0 0.0
      %982 = vmatprep.subr.mxu0 0.0
      %983 = vmatpush1.msra.mxu0 0.0
      %984 = vmatprep.subr.mxu0 0.0
      %985 = vmatpush1.msra.mxu0 0.0
      %986 = vmatprep.subr.mxu0 0.0
      %987 = vmatpush1.msra.mxu0 0.0
      %988 = vmatprep.subr.mxu0 0.0
      %989 = vmatpush1.msra.mxu0 0.0
      %990 = vmatprep.subr.mxu0 0.0
      %991 = vmatpush1.msra.mxu0 0.0
      %992 = vmatprep.subr.mxu0 0.0
      %993 = vmatpush1.msra.mxu0 0.0
      %994 = vmatprep.subr.mxu0 0.0
      %995 = vmatpush1.msra.mxu0 0.0
      %996 = vmatprep.subr.mxu0 0.0
      %997 = vmatpush1.msra.mxu0 0.0
      %998 = vmatprep.mubr.f32.mxu0 0.0
      %999 = vmatmul.mubr.f32.gmra.mrb[0].mxu0 %v839
      %v1000 = vpop.f32.mrb[0].mxu0
      %v1001 = vadd.f32 %v835, %v1000
      %v1002 = vpop.f32.mrb[0].mxu0
      %1003 = vmatprep.mubr.f32.mxu0 0.0
      %1004 = vmatmul.mubr.f32.gmra.mrb[0].mxu0 %v842
      %v1005 = vpop.f32.mrb[0].mxu0
      %v1006 = vadd.f32 %v835, %v1005
      %v1007 = vpop.f32.mrb[0].mxu0
      %1008 = vmatprep.mubr.f32.mxu0 0.0
      %1009 = vmatmul.mubr.f32.gmra.mrb[0].mxu0 %v845
      %v1010 = vpop.f32.mrb[0].mxu0
      %v1011 = vadd.f32 %v835, %v1010
      %v1012 = vpop.f32.mrb[0].mxu0
      %1013 = vmatprep.mubr.f32.mxu0 0.0
      %1014 = vmatmul.mubr.f32.gmra.mrb[0].mxu0 %v848
      %v1015 = vpop.f32.mrb[0].mxu0
      %v1016 = vadd.f32 %v835, %v1015
      %v1017 = vpop.f32.mrb[0].mxu0
      %1018 = vmatprep.mubr.f32.mxu0 0.0
      %1019 = vmatmul.mubr.f32.gmra.mrb[0].mxu0 %v851
      %v1020 = vpop.f32.mrb[0].mxu0
      %v1021 = vadd.f32 %v835, %v1020
      %v1022 = vpop.f32.mrb[0].mxu0
      %1023 = vmatprep.mubr.f32.mxu0 0.0
      %1024 = vmatmul.mubr.f32.gmra.mrb[0].mxu0 %v854
      %v1025 = vpop.f32.mrb[0].mxu0
      %v1026 = vadd.f32 %v835, %v1025
      %v1027 = vpop.f32.mrb[0].mxu0
      %1028 = vmatprep.mubr.f32.mxu0 0.0
      %1029 = vmatmul.mubr.f32.gmra.mrb[0].mxu0 %v857
      %v1030 = vpop.f32.mrb[0].mxu0
      %v1031 = vadd.f32 %v835, %v1030
      %v1032 = vpop.f32.mrb[0].mxu0
      %1033 = vmatprep.mubr.f32.mxu0 0.0
      %1034 = vmatmul.mubr.f32.gmra.mrb[0].mxu0 %v860
      %v1035 = vpop.f32.mrb[0].mxu0
      %v1036 = vadd.f32 %v835, %v1035
      %v1037 = vpop.f32.mrb[0].mxu0
      %1038 = vmatprep.mubr.f32.mxu0 0.0
      %1039 = vmatmul.mubr.f32.gmra.mrb[0].mxu0 %v863
      %v1040 = vpop.f32.mrb[0].mxu0
      %v1041 = vadd.f32 %v835, %v1040
      %v1042 = vpop.f32.mrb[0].mxu0
      %1043 = vmatprep.mubr.f32.mxu0 0.0
      %1044 = vmatmul.mubr.f32.gmra.mrb[0].mxu0 %v866
      %v1045 = vpop.f32.mrb[0].mxu0
      %v1046 = vadd.f32 %v835, %v1045
      %v1047 = vpop.f32.mrb[0].mxu0
      %1048 = vmatprep.mubr.f32.mxu0 0.0
      %1049 = vmatmul.mubr.f32.gmra.mrb[0].mxu0 %v869
      %v1050 = vpop.f32.mrb[0].mxu0
      %v1051 = vadd.f32 %v835, %v1050
      %v1052 = vpop.f32.mrb[0].mxu0
      %1053 = vmatprep.mubr.f32.mxu0 0.0
      %1054 = vmatmul.mubr.f32.gmra.mrb[0].mxu0 %v872
      %v1055 = vpop.f32.mrb[0].mxu0
      %v1056 = vadd.f32 %v835, %v1055
      %v1057 = vpop.f32.mrb[0].mxu0
      %1058 = vmatprep.mubr.f32.mxu0 0.0
      %1059 = vmatmul.mubr.f32.gmra.mrb[0].mxu0 %v875
      %v1060 = vpop.f32.mrb[0].mxu0
      %v1061 = vadd.f32 %v835, %v1060
      %v1062 = vpop.f32.mrb[0].mxu0
      %1063 = vmatprep.mubr.f32.mxu0 0.0
      %1064 = vmatmul.mubr.f32.gmra.mrb[0].mxu0 %v878
      %v1065 = vpop.f32.mrb[0].mxu0
      %v1066 = vadd.f32 %v835, %v1065
      %v1067 = vpop.f32.mrb[0].mxu0
      %1068 = vmatprep.mubr.f32.mxu0 0.0
      %1069 = vmatmul.mubr.f32.gmra.mrb[0].mxu0 %v881
      %v1070 = vpop.f32.mrb[0].mxu0
      %v1071 = vadd.f32 %v835, %v1070
      %v1072 = vpop.f32.mrb[0].mxu0
      %1073 = vmatprep.mubr.f32.mxu0 0.0
      %1074 = vmatmul.mubr.f32.gmra.mrb[0].mxu0 %v884
      %v1075 = vpop.f32.mrb[0].mxu0
      %v1076 = vadd.f32 %v835, %v1075
      %v1077 = vpop.f32.mrb[0].mxu0
      %1078 = vmatprep.mubr.f32.mxu0 0.0
      %1079 = vmatmul.mubr.f32.gmra.mrb[0].mxu0 %v887
      %v1080 = vpop.f32.mrb[0].mxu0
      %v1081 = vadd.f32 %v835, %v1080
      %v1082 = vpop.f32.mrb[0].mxu0
      %1083 = vmatprep.mubr.f32.mxu0 0.0
      %1084 = vmatmul.mubr.f32.gmra.mrb[0].mxu0 %v890
      %v1085 = vpop.f32.mrb[0].mxu0
      %v1086 = vadd.f32 %v835, %v1085
      %v1087 = vpop.f32.mrb[0].mxu0
      %1088 = vmatprep.mubr.f32.mxu0 0.0
      %1089 = vmatmul.mubr.f32.gmra.mrb[0].mxu0 %v893
      %v1090 = vpop.f32.mrb[0].mxu0
      %v1091 = vadd.f32 %v835, %v1090
      %v1092 = vpop.f32.mrb[0].mxu0
      %1093 = vmatprep.mubr.f32.mxu0 0.0
      %1094 = vmatmul.mubr.f32.gmra.mrb[0].mxu0 %v896
      %v1095 = vpop.f32.mrb[0].mxu0
      %v1096 = vadd.f32 %v835, %v1095
      %v1097 = vpop.f32.mrb[0].mxu0
      %1098 = vmatprep.mubr.f32.mxu0 0.0
      %1099 = vmatmul.mubr.f32.gmra.mrb[0].mxu0 %v899
      %v1100 = vpop.f32.mrb[0].mxu0
      %v1101 = vadd.f32 %v835, %v1100
      %v1102 = vpop.f32.mrb[0].mxu0
      %1103 = vmatprep.mubr.f32.mxu0 0.0
      %1104 = vmatmul.mubr.f32.gmra.mrb[0].mxu0 %v902
      %v1105 = vpop.f32.mrb[0].mxu0
      %v1106 = vadd.f32 %v835, %v1105
      %v1107 = vpop.f32.mrb[0].mxu0
      %1108 = vmatprep.mubr.f32.mxu0 0.0
      %1109 = vmatmul.mubr.f32.gmra.mrb[0].mxu0 %v905
      %v1110 = vpop.f32.mrb[0].mxu0
      %v1111 = vadd.f32 %v835, %v1110
      %v1112 = vpop.f32.mrb[0].mxu0
      %1113 = vmatprep.mubr.f32.mxu0 0.0
      %1114 = vmatmul.mubr.f32.gmra.mrb[0].mxu0 %v908
      %v1115 = vpop.f32.mrb[0].mxu0
      %v1116 = vadd.f32 %v835, %v1115
      %v1117 = vpop.f32.mrb[0].mxu0
      %1118 = vmatprep.mubr.f32.mxu0 0.0
      %1119 = vmatmul.mubr.f32.gmra.mrb[0].mxu0 %v911
      %v1120 = vpop.f32.mrb[0].mxu0
      %v1121 = vadd.f32 %v835, %v1120
      %v1122 = vpop.f32.mrb[0].mxu0
      %1123 = vmatprep.mubr.f32.mxu0 0.0
      %1124 = vmatmul.mubr.f32.gmra.mrb[0].mxu0 %v914
      %v1125 = vpop.f32.mrb[0].mxu0
      %v1126 = vadd.f32 %v835, %v1125
      %v1127 = vpop.f32.mrb[0].mxu0
      %1128 = vmatprep.mubr.f32.mxu0 0.0
      %1129 = vmatmul.mubr.f32.gmra.mrb[0].mxu0 %v917
      %v1130 = vpop.f32.mrb[0].mxu0
      %v1131 = vadd.f32 %v835, %v1130
      %v1132 = vpop.f32.mrb[0].mxu0
      %1133 = vmatprep.mubr.f32.mxu0 0.0
      %1134 = vmatmul.mubr.f32.gmra.mrb[0].mxu0 %v920
      %v1135 = vpop.f32.mrb[0].mxu0
      %v1136 = vadd.f32 %v835, %v1135
      %v1137 = vpop.f32.mrb[0].mxu0
      %1138 = vmatprep.mubr.f32.mxu0 0.0
      %1139 = vmatmul.mubr.f32.gmra.mrb[0].mxu0 %v923
      %v1140 = vpop.f32.mrb[0].mxu0
      %v1141 = vadd.f32 %v835, %v1140
      %v1142 = vpop.f32.mrb[0].mxu0
      %1143 = vmatprep.mubr.f32.mxu0 0.0
      %1144 = vmatmul.mubr.f32.gmra.mrb[0].mxu0 %v926
      %v1145 = vpop.f32.mrb[0].mxu0
      %v1146 = vadd.f32 %v835, %v1145
      %v1147 = vpop.f32.mrb[0].mxu0
      %1148 = vmatprep.mubr.f32.mxu0 0.0
      %1149 = vmatmul.mubr.f32.gmra.mrb[0].mxu0 %v929
      %v1150 = vpop.f32.mrb[0].mxu0
      %v1151 = vadd.f32 %v835, %v1150
      %v1152 = vpop.f32.mrb[0].mxu0
      %1153 = vmatprep.mubr.f32.mxu0 0.0
      %1154 = vmatmul.mubr.f32.gmra.mrb[0].mxu0 %v932
      %v1155 = vpop.f32.mrb[0].mxu0
      %v1156 = vadd.f32 %v835, %v1155
      %v1157 = vpop.f32.mrb[0].mxu0
      %1158 = vdwg.mxu0
      %v1159 = vld [vmem:[%s7] sm:$0x1]
      %v1161 = vlaneseq
      %v1162 = vshrl.u32 %v1161, 7
      %v1163 = vsub.s32 0, %v1162
      %v1164 = vrot.slane %v1159, %v1163
      %1166 = vmatprep.subr.mxu0 0.0
      %1167 = vmatpush1.msra.mxu0 %v461
      %1168 = vmatprep.subr.mxu0 0.0
      %1169 = vmatpush1.msra.mxu0 %v462
      %1170 = vmatprep.subr.mxu0 0.0
      %1171 = vmatpush1.msra.mxu0 %v463
      %1172 = vmatprep.subr.mxu0 0.0
      %1173 = vmatpush1.msra.mxu0 %v464
      %1174 = vmatprep.subr.mxu0 0.0
      %1175 = vmatpush1.msra.mxu0 %v465
      %1176 = vmatprep.subr.mxu0 0.0
      %1177 = vmatpush1.msra.mxu0 %v466
      %1178 = vmatprep.subr.mxu0 0.0
      %1179 = vmatpush1.msra.mxu0 %v467
      %1180 = vmatprep.subr.mxu0 0.0
      %1181 = vmatpush1.msra.mxu0 %v468
      %1182 = vmatprep.subr.mxu0 0.0
      %1183 = vmatpush1.msra.mxu0 0.0
      %1184 = vmatprep.subr.mxu0 0.0
      %1185 = vmatpush1.msra.mxu0 0.0
      %1186 = vmatprep.subr.mxu0 0.0
      %1187 = vmatpush1.msra.mxu0 0.0
      %1188 = vmatprep.subr.mxu0 0.0
      %1189 = vmatpush1.msra.mxu0 0.0
      %1190 = vmatprep.subr.mxu0 0.0
      %1191 = vmatpush1.msra.mxu0 0.0
      %1192 = vmatprep.subr.mxu0 0.0
      %1193 = vmatpush1.msra.mxu0 0.0
      %1194 = vmatprep.subr.mxu0 0.0
      %1195 = vmatpush1.msra.mxu0 0.0
      %1196 = vmatprep.subr.mxu0 0.0
      %1197 = vmatpush1.msra.mxu0 0.0
      %1198 = vmatprep.subr.mxu0 0.0
      %1199 = vmatpush1.msra.mxu0 0.0
      %1200 = vmatprep.subr.mxu0 0.0
      %1201 = vmatpush1.msra.mxu0 0.0
      %1202 = vmatprep.subr.mxu0 0.0
      %1203 = vmatpush1.msra.mxu0 0.0
      %1204 = vmatprep.subr.mxu0 0.0
      %1205 = vmatpush1.msra.mxu0 0.0
      %1206 = vmatprep.subr.mxu0 0.0
      %1207 = vmatpush1.msra.mxu0 0.0
      %1208 = vmatprep.subr.mxu0 0.0
      %1209 = vmatpush1.msra.mxu0 0.0
      %1210 = vmatprep.subr.mxu0 0.0
      %1211 = vmatpush1.msra.mxu0 0.0
      %1212 = vmatprep.subr.mxu0 0.0
      %1213 = vmatpush1.msra.mxu0 0.0
      %1214 = vmatprep.subr.mxu0 0.0
      %1215 = vmatpush1.msra.mxu0 0.0
      %1216 = vmatprep.subr.mxu0 0.0
      %1217 = vmatpush1.msra.mxu0 0.0
      %1218 = vmatprep.subr.mxu0 0.0
      %1219 = vmatpush1.msra.mxu0 0.0
      %1220 = vmatprep.subr.mxu0 0.0
      %1221 = vmatpush1.msra.mxu0 0.0
      %1222 = vmatprep.subr.mxu0 0.0
      %1223 = vmatpush1.msra.mxu0 0.0
      %1224 = vmatprep.subr.mxu0 0.0
      %1225 = vmatpush1.msra.mxu0 0.0
      %1226 = vmatprep.subr.mxu0 0.0
      %1227 = vmatpush1.msra.mxu0 0.0
      %1228 = vmatprep.subr.mxu0 0.0
      %1229 = vmatpush1.msra.mxu0 0.0
      %1230 = vmatprep.mubr.f32.mxu0 0.0
      %1231 = vmatmul.mubr.f32.gmra.mrb[0].mxu0 %v839
      %v1232 = vpop.f32.mrb[0].mxu0
      %v1233 = vadd.f32 %v1164, %v1232
      %v1234 = vpop.f32.mrb[0].mxu0
      %1235 = vmatprep.mubr.f32.mxu0 0.0
      %1236 = vmatmul.mubr.f32.gmra.mrb[0].mxu0 %v842
      %v1237 = vpop.f32.mrb[0].mxu0
      %v1238 = vadd.f32 %v1164, %v1237
      %v1239 = vpop.f32.mrb[0].mxu0
      %1240 = vmatprep.mubr.f32.mxu0 0.0
      %1241 = vmatmul.mubr.f32.gmra.mrb[0].mxu0 %v845
      %v1242 = vpop.f32.mrb[0].mxu0
      %v1243 = vadd.f32 %v1164, %v1242
      %v1244 = vpop.f32.mrb[0].mxu0
      %1245 = vmatprep.mubr.f32.mxu0 0.0
      %1246 = vmatmul.mubr.f32.gmra.mrb[0].mxu0 %v848
      %v1247 = vpop.f32.mrb[0].mxu0
      %v1248 = vadd.f32 %v1164, %v1247
      %v1249 = vpop.f32.mrb[0].mxu0
      %1250 = vmatprep.mubr.f32.mxu0 0.0
      %1251 = vmatmul.mubr.f32.gmra.mrb[0].mxu0 %v851
      %v1252 = vpop.f32.mrb[0].mxu0
      %v1253 = vadd.f32 %v1164, %v1252
      %v1254 = vpop.f32.mrb[0].mxu0
      %1255 = vmatprep.mubr.f32.mxu0 0.0
      %1256 = vmatmul.mubr.f32.gmra.mrb[0].mxu0 %v854
      %v1257 = vpop.f32.mrb[0].mxu0
      %v1258 = vadd.f32 %v1164, %v1257
      %v1259 = vpop.f32.mrb[0].mxu0
      %1260 = vmatprep.mubr.f32.mxu0 0.0
      %1261 = vmatmul.mubr.f32.gmra.mrb[0].mxu0 %v857
      %v1262 = vpop.f32.mrb[0].mxu0
      %v1263 = vadd.f32 %v1164, %v1262
      %v1264 = vpop.f32.mrb[0].mxu0
      %1265 = vmatprep.mubr.f32.mxu0 0.0
      %1266 = vmatmul.mubr.f32.gmra.mrb[0].mxu0 %v860
      %v1267 = vpop.f32.mrb[0].mxu0
      %v1268 = vadd.f32 %v1164, %v1267
      %v1269 = vpop.f32.mrb[0].mxu0
      %1270 = vmatprep.mubr.f32.mxu0 0.0
      %1271 = vmatmul.mubr.f32.gmra.mrb[0].mxu0 %v863
      %v1272 = vpop.f32.mrb[0].mxu0
      %v1273 = vadd.f32 %v1164, %v1272
      %v1274 = vpop.f32.mrb[0].mxu0
      %1275 = vmatprep.mubr.f32.mxu0 0.0
      %1276 = vmatmul.mubr.f32.gmra.mrb[0].mxu0 %v866
      %v1277 = vpop.f32.mrb[0].mxu0
      %v1278 = vadd.f32 %v1164, %v1277
      %v1279 = vpop.f32.mrb[0].mxu0
      %1280 = vmatprep.mubr.f32.mxu0 0.0
      %1281 = vmatmul.mubr.f32.gmra.mrb[0].mxu0 %v869
      %v1282 = vpop.f32.mrb[0].mxu0
      %v1283 = vadd.f32 %v1164, %v1282
      %v1284 = vpop.f32.mrb[0].mxu0
      %1285 = vmatprep.mubr.f32.mxu0 0.0
      %1286 = vmatmul.mubr.f32.gmra.mrb[0].mxu0 %v872
      %v1287 = vpop.f32.mrb[0].mxu0
      %v1288 = vadd.f32 %v1164, %v1287
      %v1289 = vpop.f32.mrb[0].mxu0
      %1290 = vmatprep.mubr.f32.mxu0 0.0
      %1291 = vmatmul.mubr.f32.gmra.mrb[0].mxu0 %v875
      %v1292 = vpop.f32.mrb[0].mxu0
      %v1293 = vadd.f32 %v1164, %v1292
      %v1294 = vpop.f32.mrb[0].mxu0
      %1295 = vmatprep.mubr.f32.mxu0 0.0
      %1296 = vmatmul.mubr.f32.gmra.mrb[0].mxu0 %v878
      %v1297 = vpop.f32.mrb[0].mxu0
      %v1298 = vadd.f32 %v1164, %v1297
      %v1299 = vpop.f32.mrb[0].mxu0
      %1300 = vmatprep.mubr.f32.mxu0 0.0
      %1301 = vmatmul.mubr.f32.gmra.mrb[0].mxu0 %v881
      %v1302 = vpop.f32.mrb[0].mxu0
      %v1303 = vadd.f32 %v1164, %v1302
      %v1304 = vpop.f32.mrb[0].mxu0
      %1305 = vmatprep.mubr.f32.mxu0 0.0
      %1306 = vmatmul.mubr.f32.gmra.mrb[0].mxu0 %v884
      %v1307 = vpop.f32.mrb[0].mxu0
      %v1308 = vadd.f32 %v1164, %v1307
      %v1309 = vpop.f32.mrb[0].mxu0
      %1310 = vmatprep.mubr.f32.mxu0 0.0
      %1311 = vmatmul.mubr.f32.gmra.mrb[0].mxu0 %v887
      %v1312 = vpop.f32.mrb[0].mxu0
      %v1313 = vadd.f32 %v1164, %v1312
      %v1314 = vpop.f32.mrb[0].mxu0
      %1315 = vmatprep.mubr.f32.mxu0 0.0
      %1316 = vmatmul.mubr.f32.gmra.mrb[0].mxu0 %v890
      %v1317 = vpop.f32.mrb[0].mxu0
      %v1318 = vadd.f32 %v1164, %v1317
      %v1319 = vpop.f32.mrb[0].mxu0
      %1320 = vmatprep.mubr.f32.mxu0 0.0
      %1321 = vmatmul.mubr.f32.gmra.mrb[0].mxu0 %v893
      %v1322 = vpop.f32.mrb[0].mxu0
      %v1323 = vadd.f32 %v1164, %v1322
      %v1324 = vpop.f32.mrb[0].mxu0
      %1325 = vmatprep.mubr.f32.mxu0 0.0
      %1326 = vmatmul.mubr.f32.gmra.mrb[0].mxu0 %v896
      %v1327 = vpop.f32.mrb[0].mxu0
      %v1328 = vadd.f32 %v1164, %v1327
      %v1329 = vpop.f32.mrb[0].mxu0
      %1330 = vmatprep.mubr.f32.mxu0 0.0
      %1331 = vmatmul.mubr.f32.gmra.mrb[0].mxu0 %v899
      %v1332 = vpop.f32.mrb[0].mxu0
      %v1333 = vadd.f32 %v1164, %v1332
      %v1334 = vpop.f32.mrb[0].mxu0
      %1335 = vmatprep.mubr.f32.mxu0 0.0
      %1336 = vmatmul.mubr.f32.gmra.mrb[0].mxu0 %v902
      %v1337 = vpop.f32.mrb[0].mxu0
      %v1338 = vadd.f32 %v1164, %v1337
      %v1339 = vpop.f32.mrb[0].mxu0
      %1340 = vmatprep.mubr.f32.mxu0 0.0
      %1341 = vmatmul.mubr.f32.gmra.mrb[0].mxu0 %v905
      %v1342 = vpop.f32.mrb[0].mxu0
      %v1343 = vadd.f32 %v1164, %v1342
      %v1344 = vpop.f32.mrb[0].mxu0
      %1345 = vmatprep.mubr.f32.mxu0 0.0
      %1346 = vmatmul.mubr.f32.gmra.mrb[0].mxu0 %v908
      %v1347 = vpop.f32.mrb[0].mxu0
      %v1348 = vadd.f32 %v1164, %v1347
      %v1349 = vpop.f32.mrb[0].mxu0
      %1350 = vmatprep.mubr.f32.mxu0 0.0
      %1351 = vmatmul.mubr.f32.gmra.mrb[0].mxu0 %v911
      %v1352 = vpop.f32.mrb[0].mxu0
      %v1353 = vadd.f32 %v1164, %v1352
      %v1354 = vpop.f32.mrb[0].mxu0
      %1355 = vmatprep.mubr.f32.mxu0 0.0
      %1356 = vmatmul.mubr.f32.gmra.mrb[0].mxu0 %v914
      %v1357 = vpop.f32.mrb[0].mxu0
      %v1358 = vadd.f32 %v1164, %v1357
      %v1359 = vpop.f32.mrb[0].mxu0
      %1360 = vmatprep.mubr.f32.mxu0 0.0
      %1361 = vmatmul.mubr.f32.gmra.mrb[0].mxu0 %v917
      %v1362 = vpop.f32.mrb[0].mxu0
      %v1363 = vadd.f32 %v1164, %v1362
      %v1364 = vpop.f32.mrb[0].mxu0
      %1365 = vmatprep.mubr.f32.mxu0 0.0
      %1366 = vmatmul.mubr.f32.gmra.mrb[0].mxu0 %v920
      %v1367 = vpop.f32.mrb[0].mxu0
      %v1368 = vadd.f32 %v1164, %v1367
      %v1369 = vpop.f32.mrb[0].mxu0
      %1370 = vmatprep.mubr.f32.mxu0 0.0
      %1371 = vmatmul.mubr.f32.gmra.mrb[0].mxu0 %v923
      %v1372 = vpop.f32.mrb[0].mxu0
      %v1373 = vadd.f32 %v1164, %v1372
      %v1374 = vpop.f32.mrb[0].mxu0
      %1375 = vmatprep.mubr.f32.mxu0 0.0
      %1376 = vmatmul.mubr.f32.gmra.mrb[0].mxu0 %v926
      %v1377 = vpop.f32.mrb[0].mxu0
      %v1378 = vadd.f32 %v1164, %v1377
      %v1379 = vpop.f32.mrb[0].mxu0
      %1380 = vmatprep.mubr.f32.mxu0 0.0
      %1381 = vmatmul.mubr.f32.gmra.mrb[0].mxu0 %v929
      %v1382 = vpop.f32.mrb[0].mxu0
      %v1383 = vadd.f32 %v1164, %v1382
      %v1384 = vpop.f32.mrb[0].mxu0
      %1385 = vmatprep.mubr.f32.mxu0 0.0
      %1386 = vmatmul.mubr.f32.gmra.mrb[0].mxu0 %v932
      %v1387 = vpop.f32.mrb[0].mxu0
      %v1388 = vadd.f32 %v1164, %v1387
      %v1389 = vpop.f32.mrb[0].mxu0
      %1390 = vdwg.mxu0
      %v1391 = vtanh.pop %v1233
      %v1392 = vtanh.pop %v1238
      %v1393 = vtanh.pop %v1243
      %v1394 = vtanh.pop %v1248
      %v1395 = vtanh.pop %v1253
      %v1396 = vtanh.pop %v1258
      %v1397 = vtanh.pop %v1263
      %v1398 = vtanh.pop %v1268
      %v1399 = vtanh.pop %v1273
      %v1400 = vtanh.pop %v1278
      %v1401 = vtanh.pop %v1283
      %v1402 = vtanh.pop %v1288
      %v1403 = vtanh.pop %v1293
      %v1404 = vtanh.pop %v1298
      %v1405 = vtanh.pop %v1303
      %v1406 = vtanh.pop %v1308
      %v1407 = vtanh.pop %v1313
      %v1408 = vtanh.pop %v1318
      %v1409 = vtanh.pop %v1323
      %v1410 = vtanh.pop %v1328
      %v1411 = vtanh.pop %v1333
      %v1412 = vtanh.pop %v1338
      %v1413 = vtanh.pop %v1343
      %v1414 = vtanh.pop %v1348
      %v1415 = vtanh.pop %v1353
      %v1416 = vtanh.pop %v1358
      %v1417 = vtanh.pop %v1363
      %v1418 = vtanh.pop %v1368
      %v1419 = vtanh.pop %v1373
      %v1420 = vtanh.pop %v1378
      %v1421 = vtanh.pop %v1383
      %v1422 = vtanh.pop %v1388
      %v1423 = vsub.f32 0.0, %v1391
      %v1424 = vsub.f32 0.0, %v1392
      %v1425 = vsub.f32 0.0, %v1393
      %v1426 = vsub.f32 0.0, %v1394
      %v1427 = vsub.f32 0.0, %v1395
      %v1428 = vsub.f32 0.0, %v1396
      %v1429 = vsub.f32 0.0, %v1397
      %v1430 = vsub.f32 0.0, %v1398
      %v1431 = vsub.f32 0.0, %v1399
      %v1432 = vsub.f32 0.0, %v1400
      %v1433 = vsub.f32 0.0, %v1401
      %v1434 = vsub.f32 0.0, %v1402
      %v1435 = vsub.f32 0.0, %v1403
      %v1436 = vsub.f32 0.0, %v1404
      %v1437 = vsub.f32 0.0, %v1405
      %v1438 = vsub.f32 0.0, %v1406
      %v1439 = vsub.f32 0.0, %v1407
      %v1440 = vsub.f32 0.0, %v1408
      %v1441 = vsub.f32 0.0, %v1409
      %v1442 = vsub.f32 0.0, %v1410
      %v1443 = vsub.f32 0.0, %v1411
      %v1444 = vsub.f32 0.0, %v1412
      %v1445 = vsub.f32 0.0, %v1413
      %v1446 = vsub.f32 0.0, %v1414
      %v1447 = vsub.f32 0.0, %v1415
      %v1448 = vsub.f32 0.0, %v1416
      %v1449 = vsub.f32 0.0, %v1417
      %v1450 = vsub.f32 0.0, %v1418
      %v1451 = vsub.f32 0.0, %v1419
      %v1452 = vsub.f32 0.0, %v1420
      %v1453 = vsub.f32 0.0, %v1421
      %v1454 = vsub.f32 0.0, %v1422
      %v1455 = vmul.f32 %v1423, 1.442695
      %v1456 = vpow.pop %v1455
      %v1457 = vmul.f32 %v1424, 1.442695
      %v1458 = vpow.pop %v1457
      %v1459 = vmul.f32 %v1425, 1.442695
      %v1460 = vpow.pop %v1459
      %v1461 = vmul.f32 %v1426, 1.442695
      %v1462 = vpow.pop %v1461
      %v1463 = vmul.f32 %v1427, 1.442695
      %v1464 = vpow.pop %v1463
      %v1465 = vmul.f32 %v1428, 1.442695
      %v1466 = vpow.pop %v1465
      %v1467 = vmul.f32 %v1429, 1.442695
      %v1468 = vpow.pop %v1467
      %v1469 = vmul.f32 %v1430, 1.442695
      %v1470 = vpow.pop %v1469
      %v1471 = vmul.f32 %v1431, 1.442695
      %v1472 = vpow.pop %v1471
      %v1473 = vmul.f32 %v1432, 1.442695
      %v1474 = vpow.pop %v1473
      %v1475 = vmul.f32 %v1433, 1.442695
      %v1476 = vpow.pop %v1475
      %v1477 = vmul.f32 %v1434, 1.442695
      %v1478 = vpow.pop %v1477
      %v1479 = vmul.f32 %v1435, 1.442695
      %v1480 = vpow.pop %v1479
      %v1481 = vmul.f32 %v1436, 1.442695
      %v1482 = vpow.pop %v1481
      %v1483 = vmul.f32 %v1437, 1.442695
      %v1484 = vpow.pop %v1483
      %v1485 = vmul.f32 %v1438, 1.442695
      %v1486 = vpow.pop %v1485
      %v1487 = vmul.f32 %v1439, 1.442695
      %v1488 = vpow.pop %v1487
      %v1489 = vmul.f32 %v1440, 1.442695
      %v1490 = vpow.pop %v1489
      %v1491 = vmul.f32 %v1441, 1.442695
      %v1492 = vpow.pop %v1491
      %v1493 = vmul.f32 %v1442, 1.442695
      %v1494 = vpow.pop %v1493
      %v1495 = vmul.f32 %v1443, 1.442695
      %v1496 = vpow.pop %v1495
      %v1497 = vmul.f32 %v1444, 1.442695
      %v1498 = vpow.pop %v1497
      %v1499 = vmul.f32 %v1445, 1.442695
      %v1500 = vpow.pop %v1499
      %v1501 = vmul.f32 %v1446, 1.442695
      %v1502 = vpow.pop %v1501
      %v1503 = vmul.f32 %v1447, 1.442695
      %v1504 = vpow.pop %v1503
      %v1505 = vmul.f32 %v1448, 1.442695
      %v1506 = vpow.pop %v1505
      %v1507 = vmul.f32 %v1449, 1.442695
      %v1508 = vpow.pop %v1507
      %v1509 = vmul.f32 %v1450, 1.442695
      %v1510 = vpow.pop %v1509
      %v1511 = vmul.f32 %v1451, 1.442695
      %v1512 = vpow.pop %v1511
      %v1513 = vmul.f32 %v1452, 1.442695
      %v1514 = vpow.pop %v1513
      %v1515 = vmul.f32 %v1453, 1.442695
      %v1516 = vpow.pop %v1515
      %v1517 = vmul.f32 %v1454, 1.442695
      %v1518 = vpow.pop %v1517
      %v1519 = vld [vmem:[%s8] sm:$0x1]
      %v1520 = vld [vmem:[%s9] sm:$0x1]
      %v1521 = vmul.f32 %v417, %v417
      %v1522 = vmul.f32 %v418, %v418
      %v1523 = vmul.f32 %v419, %v419
      %v1524 = vmul.f32 %v420, %v420
      %v1525 = vmul.f32 %v421, %v421
      %v1526 = vmul.f32 %v422, %v422
      %v1527 = vmul.f32 %v423, %v423
      %v1528 = vmul.f32 %v424, %v424
      %v1529 = vmul.f32 %v425, %v425
      %v1530 = vmul.f32 %v426, %v426
      %v1531 = vmul.f32 %v427, %v427
      %v1532 = vmul.f32 %v428, %v428
      %v1533 = vmul.f32 %v429, %v429
      %v1534 = vmul.f32 %v430, %v430
      %v1535 = vmul.f32 %v431, %v431
      %v1536 = vmul.f32 %v432, %v432
      %v1537 = vmul.f32 %v433, %v433
      %v1538 = vmul.f32 %v434, %v434
      %v1539 = vmul.f32 %v435, %v435
      %v1540 = vmul.f32 %v436, %v436
      %v1541 = vmul.f32 %v437, %v437
      %v1542 = vmul.f32 %v438, %v438
      %v1543 = vmul.f32 %v439, %v439
      %v1544 = vmul.f32 %v440, %v440
      %v1545 = vmul.f32 %v441, %v441
      %v1546 = vmul.f32 %v442, %v442
      %v1547 = vmul.f32 %v443, %v443
      %v1548 = vmul.f32 %v444, %v444
      %v1549 = vmul.f32 %v445, %v445
      %v1550 = vmul.f32 %v446, %v446
      %v1551 = vmul.f32 %v447, %v447
      %v1552 = vmul.f32 %v448, %v448
      %v1554 = vlaneseq
      %v1555 = vshrl.u32 %v1554, 7
      %v1556 = vsub.s32 0, %v1555
      %v1557 = vrot.slane %v1520, %v1556
      %v1559 = vsub.f32 %v1521, %v1557
      %v1560 = vsub.f32 %v1522, %v1557
      %v1561 = vsub.f32 %v1523, %v1557
      %v1562 = vsub.f32 %v1524, %v1557
      %v1563 = vsub.f32 %v1525, %v1557
      %v1564 = vsub.f32 %v1526, %v1557
      %v1565 = vsub.f32 %v1527, %v1557
      %v1566 = vsub.f32 %v1528, %v1557
      %v1567 = vsub.f32 %v1529, %v1557
      %v1568 = vsub.f32 %v1530, %v1557
      %v1569 = vsub.f32 %v1531, %v1557
      %v1570 = vsub.f32 %v1532, %v1557
      %v1571 = vsub.f32 %v1533, %v1557
      %v1572 = vsub.f32 %v1534, %v1557
      %v1573 = vsub.f32 %v1535, %v1557
      %v1574 = vsub.f32 %v1536, %v1557
      %v1575 = vsub.f32 %v1537, %v1557
      %v1576 = vsub.f32 %v1538, %v1557
      %v1577 = vsub.f32 %v1539, %v1557
      %v1578 = vsub.f32 %v1540, %v1557
      %v1579 = vsub.f32 %v1541, %v1557
      %v1580 = vsub.f32 %v1542, %v1557
      %v1581 = vsub.f32 %v1543, %v1557
      %v1582 = vsub.f32 %v1544, %v1557
      %v1583 = vsub.f32 %v1545, %v1557
      %v1584 = vsub.f32 %v1546, %v1557
      %v1585 = vsub.f32 %v1547, %v1557
      %v1586 = vsub.f32 %v1548, %v1557
      %v1587 = vsub.f32 %v1549, %v1557
      %v1588 = vsub.f32 %v1550, %v1557
      %v1589 = vsub.f32 %v1551, %v1557
      %v1590 = vsub.f32 %v1552, %v1557
      %v1591 = vmul.f32 %v1001, 2.0
      %v1592 = vmul.f32 %v1006, 2.0
      %v1593 = vmul.f32 %v1011, 2.0
      %v1594 = vmul.f32 %v1016, 2.0
      %v1595 = vmul.f32 %v1021, 2.0
      %v1596 = vmul.f32 %v1026, 2.0
      %v1597 = vmul.f32 %v1031, 2.0
      %v1598 = vmul.f32 %v1036, 2.0
      %v1599 = vmul.f32 %v1041, 2.0
      %v1600 = vmul.f32 %v1046, 2.0
      %v1601 = vmul.f32 %v1051, 2.0
      %v1602 = vmul.f32 %v1056, 2.0
      %v1603 = vmul.f32 %v1061, 2.0
      %v1604 = vmul.f32 %v1066, 2.0
      %v1605 = vmul.f32 %v1071, 2.0
      %v1606 = vmul.f32 %v1076, 2.0
      %v1607 = vmul.f32 %v1081, 2.0
      %v1608 = vmul.f32 %v1086, 2.0
      %v1609 = vmul.f32 %v1091, 2.0
      %v1610 = vmul.f32 %v1096, 2.0
      %v1611 = vmul.f32 %v1101, 2.0
      %v1612 = vmul.f32 %v1106, 2.0
      %v1613 = vmul.f32 %v1111, 2.0
      %v1614 = vmul.f32 %v1116, 2.0
      %v1615 = vmul.f32 %v1121, 2.0
      %v1616 = vmul.f32 %v1126, 2.0
      %v1617 = vmul.f32 %v1131, 2.0
      %v1618 = vmul.f32 %v1136, 2.0
      %v1619 = vmul.f32 %v1141, 2.0
      %v1620 = vmul.f32 %v1146, 2.0
      %v1621 = vmul.f32 %v1151, 2.0
      %v1622 = vmul.f32 %v1156, 2.0
      %v1624 = vlaneseq
      %v1625 = vshrl.u32 %v1624, 7
      %v1626 = vsub.s32 0, %v1625
      %v1627 = vrot.slane %v1519, %v1626
      %v1629 = vsub.f32 %v1627, %v417
      %v1630 = vsub.f32 %v1627, %v418
      %v1631 = vsub.f32 %v1627, %v419
      %v1632 = vsub.f32 %v1627, %v420
      %v1633 = vsub.f32 %v1627, %v421
      %v1634 = vsub.f32 %v1627, %v422
      %v1635 = vsub.f32 %v1627, %v423
      %v1636 = vsub.f32 %v1627, %v424
      %v1637 = vsub.f32 %v1627, %v425
      %v1638 = vsub.f32 %v1627, %v426
      %v1639 = vsub.f32 %v1627, %v427
      %v1640 = vsub.f32 %v1627, %v428
      %v1641 = vsub.f32 %v1627, %v429
      %v1642 = vsub.f32 %v1627, %v430
      %v1643 = vsub.f32 %v1627, %v431
      %v1644 = vsub.f32 %v1627, %v432
      %v1645 = vsub.f32 %v1627, %v433
      %v1646 = vsub.f32 %v1627, %v434
      %v1647 = vsub.f32 %v1627, %v435
      %v1648 = vsub.f32 %v1627, %v436
      %v1649 = vsub.f32 %v1627, %v437
      %v1650 = vsub.f32 %v1627, %v438
      %v1651 = vsub.f32 %v1627, %v439
      %v1652 = vsub.f32 %v1627, %v440
      %v1653 = vsub.f32 %v1627, %v441
      %v1654 = vsub.f32 %v1627, %v442
      %v1655 = vsub.f32 %v1627, %v443
      %v1656 = vsub.f32 %v1627, %v444
      %v1657 = vsub.f32 %v1627, %v445
      %v1658 = vsub.f32 %v1627, %v446
      %v1659 = vsub.f32 %v1627, %v447
      %v1660 = vsub.f32 %v1627, %v448
      %v1661 = vmul.f32 %v1591, %v1629
      %v1662 = vmul.f32 %v1592, %v1630
      %v1663 = vmul.f32 %v1593, %v1631
      %v1664 = vmul.f32 %v1594, %v1632
      %v1665 = vmul.f32 %v1595, %v1633
      %v1666 = vmul.f32 %v1596, %v1634
      %v1667 = vmul.f32 %v1597, %v1635
      %v1668 = vmul.f32 %v1598, %v1636
      %v1669 = vmul.f32 %v1599, %v1637
      %v1670 = vmul.f32 %v1600, %v1638
      %v1671 = vmul.f32 %v1601, %v1639
      %v1672 = vmul.f32 %v1602, %v1640
      %v1673 = vmul.f32 %v1603, %v1641
      %v1674 = vmul.f32 %v1604, %v1642
      %v1675 = vmul.f32 %v1605, %v1643
      %v1676 = vmul.f32 %v1606, %v1644
      %v1677 = vmul.f32 %v1607, %v1645
      %v1678 = vmul.f32 %v1608, %v1646
      %v1679 = vmul.f32 %v1609, %v1647
      %v1680 = vmul.f32 %v1610, %v1648
      %v1681 = vmul.f32 %v1611, %v1649
      %v1682 = vmul.f32 %v1612, %v1650
      %v1683 = vmul.f32 %v1613, %v1651
      %v1684 = vmul.f32 %v1614, %v1652
      %v1685 = vmul.f32 %v1615, %v1653
      %v1686 = vmul.f32 %v1616, %v1654
      %v1687 = vmul.f32 %v1617, %v1655
      %v1688 = vmul.f32 %v1618, %v1656
      %v1689 = vmul.f32 %v1619, %v1657
      %v1690 = vmul.f32 %v1620, %v1658
      %v1691 = vmul.f32 %v1621, %v1659
      %v1692 = vmul.f32 %v1622, %v1660
      %v1693 = vadd.f32 %v1559, %v1661
      %v1694 = vadd.f32 %v1560, %v1662
      %v1695 = vadd.f32 %v1561, %v1663
      %v1696 = vadd.f32 %v1562, %v1664
      %v1697 = vadd.f32 %v1563, %v1665
      %v1698 = vadd.f32 %v1564, %v1666
      %v1699 = vadd.f32 %v1565, %v1667
      %v1700 = vadd.f32 %v1566, %v1668
      %v1701 = vadd.f32 %v1567, %v1669
      %v1702 = vadd.f32 %v1568, %v1670
      %v1703 = vadd.f32 %v1569, %v1671
      %v1704 = vadd.f32 %v1570, %v1672
      %v1705 = vadd.f32 %v1571, %v1673
      %v1706 = vadd.f32 %v1572, %v1674
      %v1707 = vadd.f32 %v1573, %v1675
      %v1708 = vadd.f32 %v1574, %v1676
      %v1709 = vadd.f32 %v1575, %v1677
      %v1710 = vadd.f32 %v1576, %v1678
      %v1711 = vadd.f32 %v1577, %v1679
      %v1712 = vadd.f32 %v1578, %v1680
      %v1713 = vadd.f32 %v1579, %v1681
      %v1714 = vadd.f32 %v1580, %v1682
      %v1715 = vadd.f32 %v1581, %v1683
      %v1716 = vadd.f32 %v1582, %v1684
      %v1717 = vadd.f32 %v1583, %v1685
      %v1718 = vadd.f32 %v1584, %v1686
      %v1719 = vadd.f32 %v1585, %v1687
      %v1720 = vadd.f32 %v1586, %v1688
      %v1721 = vadd.f32 %v1587, %v1689
      %v1722 = vadd.f32 %v1588, %v1690
      %v1723 = vadd.f32 %v1589, %v1691
      %v1724 = vadd.f32 %v1590, %v1692
      %v1725 = vmul.f32 %v1456, -0.5
      %v1726 = vmul.f32 %v1458, -0.5
      %v1727 = vmul.f32 %v1460, -0.5
      %v1728 = vmul.f32 %v1462, -0.5
      %v1729 = vmul.f32 %v1464, -0.5
      %v1730 = vmul.f32 %v1466, -0.5
      %v1731 = vmul.f32 %v1468, -0.5
      %v1732 = vmul.f32 %v1470, -0.5
      %v1733 = vmul.f32 %v1472, -0.5
      %v1734 = vmul.f32 %v1474, -0.5
      %v1735 = vmul.f32 %v1476, -0.5
      %v1736 = vmul.f32 %v1478, -0.5
      %v1737 = vmul.f32 %v1480, -0.5
      %v1738 = vmul.f32 %v1482, -0.5
      %v1739 = vmul.f32 %v1484, -0.5
      %v1740 = vmul.f32 %v1486, -0.5
      %v1741 = vmul.f32 %v1488, -0.5
      %v1742 = vmul.f32 %v1490, -0.5
      %v1743 = vmul.f32 %v1492, -0.5
      %v1744 = vmul.f32 %v1494, -0.5
      %v1745 = vmul.f32 %v1496, -0.5
      %v1746 = vmul.f32 %v1498, -0.5
      %v1747 = vmul.f32 %v1500, -0.5
      %v1748 = vmul.f32 %v1502, -0.5
      %v1749 = vmul.f32 %v1504, -0.5
      %v1750 = vmul.f32 %v1506, -0.5
      %v1751 = vmul.f32 %v1508, -0.5
      %v1752 = vmul.f32 %v1510, -0.5
      %v1753 = vmul.f32 %v1512, -0.5
      %v1754 = vmul.f32 %v1514, -0.5
      %v1755 = vmul.f32 %v1516, -0.5
      %v1756 = vmul.f32 %v1518, -0.5
      %v1757 = vmul.f32 %v1693, %v1725
      %v1758 = vmul.f32 %v1694, %v1726
      %v1759 = vmul.f32 %v1695, %v1727
      %v1760 = vmul.f32 %v1696, %v1728
      %v1761 = vmul.f32 %v1697, %v1729
      %v1762 = vmul.f32 %v1698, %v1730
      %v1763 = vmul.f32 %v1699, %v1731
      %v1764 = vmul.f32 %v1700, %v1732
      %v1765 = vmul.f32 %v1701, %v1733
      %v1766 = vmul.f32 %v1702, %v1734
      %v1767 = vmul.f32 %v1703, %v1735
      %v1768 = vmul.f32 %v1704, %v1736
      %v1769 = vmul.f32 %v1705, %v1737
      %v1770 = vmul.f32 %v1706, %v1738
      %v1771 = vmul.f32 %v1707, %v1739
      %v1772 = vmul.f32 %v1708, %v1740
      %v1773 = vmul.f32 %v1709, %v1741
      %v1774 = vmul.f32 %v1710, %v1742
      %v1775 = vmul.f32 %v1711, %v1743
      %v1776 = vmul.f32 %v1712, %v1744
      %v1777 = vmul.f32 %v1713, %v1745
      %v1778 = vmul.f32 %v1714, %v1746
      %v1779 = vmul.f32 %v1715, %v1747
      %v1780 = vmul.f32 %v1716, %v1748
      %v1781 = vmul.f32 %v1717, %v1749
      %v1782 = vmul.f32 %v1718, %v1750
      %v1783 = vmul.f32 %v1719, %v1751
      %v1784 = vmul.f32 %v1720, %v1752
      %v1785 = vmul.f32 %v1721, %v1753
      %v1786 = vmul.f32 %v1722, %v1754
      %v1787 = vmul.f32 %v1723, %v1755
      %v1788 = vmul.f32 %v1724, %v1756
      %vm1789 = vcmask 130048
      %v1790 = vsel %vm1789, %v1757, 0.0
      %1791 = vadd.xlane.f32.xlu0 %v1790
      %v1792 = vpop.xlane.xlu0 %1791
      %v1793 = vsel %vm1789, %v1758, 0.0
      %1794 = vadd.xlane.f32.xlu0 %v1793
      %v1795 = vpop.xlane.xlu0 %1794
      %v1796 = vsel %vm1789, %v1759, 0.0
      %1797 = vadd.xlane.f32.xlu0 %v1796
      %v1798 = vpop.xlane.xlu0 %1797
      %v1799 = vsel %vm1789, %v1760, 0.0
      %1800 = vadd.xlane.f32.xlu0 %v1799
      %v1801 = vpop.xlane.xlu0 %1800
      %v1802 = vsel %vm1789, %v1761, 0.0
      %1803 = vadd.xlane.f32.xlu0 %v1802
      %v1804 = vpop.xlane.xlu0 %1803
      %v1805 = vsel %vm1789, %v1762, 0.0
      %1806 = vadd.xlane.f32.xlu0 %v1805
      %v1807 = vpop.xlane.xlu0 %1806
      %v1808 = vsel %vm1789, %v1763, 0.0
      %1809 = vadd.xlane.f32.xlu0 %v1808
      %v1810 = vpop.xlane.xlu0 %1809
      %v1811 = vsel %vm1789, %v1764, 0.0
      %1812 = vadd.xlane.f32.xlu0 %v1811
      %v1813 = vpop.xlane.xlu0 %1812
      %v1814 = vsel %vm1789, %v1765, 0.0
      %1815 = vadd.xlane.f32.xlu0 %v1814
      %v1816 = vpop.xlane.xlu0 %1815
      %v1817 = vsel %vm1789, %v1766, 0.0
      %1818 = vadd.xlane.f32.xlu0 %v1817
      %v1819 = vpop.xlane.xlu0 %1818
      %v1820 = vsel %vm1789, %v1767, 0.0
      %1821 = vadd.xlane.f32.xlu0 %v1820
      %v1822 = vpop.xlane.xlu0 %1821
      %v1823 = vsel %vm1789, %v1768, 0.0
      %1824 = vadd.xlane.f32.xlu0 %v1823
      %v1825 = vpop.xlane.xlu0 %1824
      %v1826 = vsel %vm1789, %v1769, 0.0
      %1827 = vadd.xlane.f32.xlu0 %v1826
      %v1828 = vpop.xlane.xlu0 %1827
      %v1829 = vsel %vm1789, %v1770, 0.0
      %1830 = vadd.xlane.f32.xlu0 %v1829
      %v1831 = vpop.xlane.xlu0 %1830
      %v1832 = vsel %vm1789, %v1771, 0.0
      %1833 = vadd.xlane.f32.xlu0 %v1832
      %v1834 = vpop.xlane.xlu0 %1833
      %v1835 = vsel %vm1789, %v1772, 0.0
      %1836 = vadd.xlane.f32.xlu0 %v1835
      %v1837 = vpop.xlane.xlu0 %1836
      %v1838 = vsel %vm1789, %v1773, 0.0
      %1839 = vadd.xlane.f32.xlu0 %v1838
      %v1840 = vpop.xlane.xlu0 %1839
      %v1841 = vsel %vm1789, %v1774, 0.0
      %1842 = vadd.xlane.f32.xlu0 %v1841
      %v1843 = vpop.xlane.xlu0 %1842
      %v1844 = vsel %vm1789, %v1775, 0.0
      %1845 = vadd.xlane.f32.xlu0 %v1844
      %v1846 = vpop.xlane.xlu0 %1845
      %v1847 = vsel %vm1789, %v1776, 0.0
      %1848 = vadd.xlane.f32.xlu0 %v1847
      %v1849 = vpop.xlane.xlu0 %1848
      %v1850 = vsel %vm1789, %v1777, 0.0
      %1851 = vadd.xlane.f32.xlu0 %v1850
      %v1852 = vpop.xlane.xlu0 %1851
      %v1853 = vsel %vm1789, %v1778, 0.0
      %1854 = vadd.xlane.f32.xlu0 %v1853
      %v1855 = vpop.xlane.xlu0 %1854
      %v1856 = vsel %vm1789, %v1779, 0.0
      %1857 = vadd.xlane.f32.xlu0 %v1856
      %v1858 = vpop.xlane.xlu0 %1857
      %v1859 = vsel %vm1789, %v1780, 0.0
      %1860 = vadd.xlane.f32.xlu0 %v1859
      %v1861 = vpop.xlane.xlu0 %1860
      %v1862 = vsel %vm1789, %v1781, 0.0
      %1863 = vadd.xlane.f32.xlu0 %v1862
      %v1864 = vpop.xlane.xlu0 %1863
      %v1865 = vsel %vm1789, %v1782, 0.0
      %1866 = vadd.xlane.f32.xlu0 %v1865
      %v1867 = vpop.xlane.xlu0 %1866
      %v1868 = vsel %vm1789, %v1783, 0.0
      %1869 = vadd.xlane.f32.xlu0 %v1868
      %v1870 = vpop.xlane.xlu0 %1869
      %v1871 = vsel %vm1789, %v1784, 0.0
      %1872 = vadd.xlane.f32.xlu0 %v1871
      %v1873 = vpop.xlane.xlu0 %1872
      %v1874 = vsel %vm1789, %v1785, 0.0
      %1875 = vadd.xlane.f32.xlu0 %v1874
      %v1876 = vpop.xlane.xlu0 %1875
      %v1877 = vsel %vm1789, %v1786, 0.0
      %1878 = vadd.xlane.f32.xlu0 %v1877
      %v1879 = vpop.xlane.xlu0 %1878
      %v1880 = vsel %vm1789, %v1787, 0.0
      %1881 = vadd.xlane.f32.xlu0 %v1880
      %v1882 = vpop.xlane.xlu0 %1881
      %v1883 = vsel %vm1789, %v1788, 0.0
      %1884 = vadd.xlane.f32.xlu0 %v1883
      %v1885 = vpop.xlane.xlu0 %1884
      %vm1886 = vcmask 7168
      %1887 = vst.msk [vmem:[%s383] sm:$0xff] %vm1886, %v1792
      %1888 = vst.msk [vmem:[%s383 + $0x8] sm:$0xff] %vm1886, %v1795
      %1889 = vst.msk [vmem:[%s383 + $0x10] sm:$0xff] %vm1886, %v1798
      %1890 = vst.msk [vmem:[%s383 + $0x18] sm:$0xff] %vm1886, %v1801
      %1891 = vst.msk [vmem:[%s383 + $0x20] sm:$0xff] %vm1886, %v1804
      %1892 = vst.msk [vmem:[%s383 + $0x28] sm:$0xff] %vm1886, %v1807
      %1893 = vst.msk [vmem:[%s383 + $0x30] sm:$0xff] %vm1886, %v1810
      %1894 = vst.msk [vmem:[%s383 + $0x38] sm:$0xff] %vm1886, %v1813
      %1895 = vst.msk [vmem:[%s383 + $0x40] sm:$0xff] %vm1886, %v1816
      %1896 = vst.msk [vmem:[%s383 + $0x48] sm:$0xff] %vm1886, %v1819
      %1897 = vst.msk [vmem:[%s383 + $0x50] sm:$0xff] %vm1886, %v1822
      %1898 = vst.msk [vmem:[%s383 + $0x58] sm:$0xff] %vm1886, %v1825
      %1899 = vst.msk [vmem:[%s383 + $0x60] sm:$0xff] %vm1886, %v1828
      %1900 = vst.msk [vmem:[%s383 + $0x68] sm:$0xff] %vm1886, %v1831
      %1901 = vst.msk [vmem:[%s383 + $0x70] sm:$0xff] %vm1886, %v1834
      %1902 = vst.msk [vmem:[%s383 + $0x78] sm:$0xff] %vm1886, %v1837
      %1903 = vst.msk [vmem:[%s383 + $0x80] sm:$0xff] %vm1886, %v1840
      %1904 = vst.msk [vmem:[%s383 + $0x88] sm:$0xff] %vm1886, %v1843
      %1905 = vst.msk [vmem:[%s383 + $0x90] sm:$0xff] %vm1886, %v1846
      %1906 = vst.msk [vmem:[%s383 + $0x98] sm:$0xff] %vm1886, %v1849
      %1907 = vst.msk [vmem:[%s383 + $0xa0] sm:$0xff] %vm1886, %v1852
      %1908 = vst.msk [vmem:[%s383 + $0xa8] sm:$0xff] %vm1886, %v1855
      %1909 = vst.msk [vmem:[%s383 + $0xb0] sm:$0xff] %vm1886, %v1858
      %1910 = vst.msk [vmem:[%s383 + $0xb8] sm:$0xff] %vm1886, %v1861
      %1911 = vst.msk [vmem:[%s383 + $0xc0] sm:$0xff] %vm1886, %v1864
      %1912 = vst.msk [vmem:[%s383 + $0xc8] sm:$0xff] %vm1886, %v1867
      %1913 = vst.msk [vmem:[%s383 + $0xd0] sm:$0xff] %vm1886, %v1870
      %1914 = vst.msk [vmem:[%s383 + $0xd8] sm:$0xff] %vm1886, %v1873
      %1915 = vst.msk [vmem:[%s383 + $0xe0] sm:$0xff] %vm1886, %v1876
      %1916 = vst.msk [vmem:[%s383 + $0xe8] sm:$0xff] %vm1886, %v1879
      %1917 = vst.msk [vmem:[%s383 + $0xf0] sm:$0xff] %vm1886, %v1882
      %1918 = vst.msk [vmem:[%s383 + $0xf8] sm:$0xff] %vm1886, %v1885
      %s1919 = smul.u32 32, %s21
      %p1920 = scmp.lt.s32.totalorder %s1919, 63
      %s1921 = scalar_select %p1920, %s1919, 63
      %s1922 = smul.addr %s1921, 8
      %s1923 = scalar_lea.vmem %s10, %s1922
      // Predicated region
      $region61: #{club_forward.1} parent=59 // pred_check
        %p1924 = pneg %p259
      $region62: #{club_forward.1} parent=59 // pred_check_branch
        %1926 = sbr.rel (%p1924) target = $region64
      $region63: #{club_forward.1} parent=59 // pred_region
        %s1927 = smul.u32 32, %s21
      $region64: #{club_forward.1} parent=59 // pred_fallthru
        _
    $region60: #{club_forward.1} parent=5 // pred_fallthru
      _
    %p1928 = scmp.le.s32.totalorder 2, %s16
    // Predicated region
    $region65: #{club_forward.1} parent=5 // pred_check
      %p1929 = pneg %p1928
    $region66: #{club_forward.1} parent=5 // pred_check_branch
      %1931 = sbr.rel (%p1929) target = $region68
    $region67: #{club_forward.1} parent=5 // pred_region
      %s1932 = ssub.s32 %s16, 2
      // Predicated region
      $region69: #{club_forward.1} parent=67 // pred_check
        %p1933 = pneg %p265
      $region70: #{club_forward.1} parent=67 // pred_check_branch
        %1935 = sbr.rel (%p1933) target = $region72
      $region71: #{club_forward.1} parent=67 // pred_region
        %s1936 = smul.u32 32, %s22
        %p1937 = scmp.lt.s32.totalorder %s1936, 63
        %s1938 = scalar_select %p1937, %s1936, 63
        %s1939 = smul.addr %s1938, 8
        %s1940 = scalar_lea.vmem %s10, %s1939
      $region72: #{club_forward.1} parent=67 // pred_fallthru
        _
    $region68: #{club_forward.1} parent=5 // pred_fallthru
      _
  $region6: #{club_forward.1} parent=0 // loop_footer
    %s20 = sadd.s32 1, %s16
  $region7: #{club_forward.1} parent=0 // loop_footer_branch
    %15 = sbr.rel target = $region3
  $region8: #{club_forward.1} parent=0 // loop_exit
    _

</llo_original>
